<compile_context>
chip_gen: v7x
topology: tpu7x:2x2x1
jax: 0.10.0
libtpu: 0.0.40
codegen_flags: <defaults>
</compile_context>

<pallas_src>
import jax
import jax.numpy as jnp
from jax.experimental import pallas as pl
from jax.experimental.pallas import tpu as pltpu

# ----------------------------- model constants -----------------------------
X_SIZE = 16
C_SIZE = 8
HIDDEN = 32
LATENT = 32
XC = X_SIZE + C_SIZE          # 24
LANES = 128

# packed-input lane offsets:   [ x | c | eps | pad ]
IN_X_OFF = 0
IN_C_OFF = X_SIZE             # 16
IN_EPS_OFF = XC               # 24   (eps occupies lanes 24:56)

# packed-output lane offsets:  [ means | log_var | z | recon | pad ]
OUT_MEAN_OFF = 0
OUT_LV_OFF = LATENT           # 32
OUT_Z_OFF = 2 * LATENT        # 64
OUT_RECON_OFF = 3 * LATENT    # 96
OUT_PAD_OFF = 3 * LATENT + X_SIZE  # 112

# parameter-slab row offsets (all multiples of 8 -> sublane aligned)
ENC_W0_R = 0      # rows   0: 24, cols 0:32   Linear(24, 32) weight
ENC_B0_R = 24     # row   24,     cols 0:32   bias
ENC_W1_R = 32     # rows  32: 64, cols 0:32   Linear(32, 32) weight
ENC_B1_R = 64     # row   64,     cols 0:32   bias
HEAD_W_R = 72     # rows  72:104, cols 0:64   fused [means | log_var] weight
HEAD_B_R = 104    # row  104,     cols 0:64   fused bias
DEC_W0Z_R = 112   # rows 112:144, cols 0:32   decoder L0 z-part
DEC_W0C_R = 144   # rows 144:152, cols 0:32   decoder L0 c-part
DEC_B0_R = 152    # row  152,     cols 0:32   bias
DEC_W1_R = 160    # rows 160:192, cols 0:16   Linear(32, 16) weight
DEC_B1_R = 192    # row  192,     cols 0:16   bias
SLAB_ROWS = 200   # padded to a multiple of 8

BATCH = 256       # demo size; kernel tiles over batch
TILE_B = 128      # rows per grid step (>= 512 recommended for real workloads)


# --------------------------------- kernel ----------------------------------
def cvae_kernel(in_ref, w_ref, out_ref):
    tb = out_ref.shape[0]

    xc = in_ref[:, IN_X_OFF:IN_X_OFF + XC]                 # [x | c]  (tb, 24)
    c = in_ref[:, IN_C_OFF:IN_C_OFF + C_SIZE]              # (tb, 8)
    eps = in_ref[:, IN_EPS_OFF:IN_EPS_OFF + LATENT]        # (tb, 32)

    # ------------- encoder -------------
    # L0: cat(x, c) @ W0 + b0 ; ReLU   (single fused matmul, K=24)
    h = jnp.dot(xc, w_ref[ENC_W0_R:ENC_W0_R + XC, 0:HIDDEN],
                preferred_element_type=jnp.float32)
    h = jnp.maximum(h + w_ref[ENC_B0_R:ENC_B0_R + 1, 0:HIDDEN], 0.0)

    # L1: Linear + ReLU
    h = jnp.dot(h, w_ref[ENC_W1_R:ENC_W1_R + HIDDEN, 0:LATENT],
                preferred_element_type=jnp.float32)
    h = jnp.maximum(h + w_ref[ENC_B1_R:ENC_B1_R + 1, 0:LATENT], 0.0)

    # fused heads: one (32, 64) matmul -> [means | log_var]
    hm = jnp.dot(h, w_ref[HEAD_W_R:HEAD_W_R + LATENT, 0:2 * LATENT],
                 preferred_element_type=jnp.float32)
    hm = hm + w_ref[HEAD_B_R:HEAD_B_R + 1, 0:2 * LATENT]
    means = hm[:, 0:LATENT]
    # F.relu on log_var matches the PyTorch reference (encoder.forward).
    log_var = jnp.maximum(hm[:, LATENT:2 * LATENT], 0.0)

    # ------------- reparameterize -------------
    z = eps * jnp.exp(0.5 * log_var) + means

    # ------------- decoder -------------
    # L0: cat(z, c) @ W0 + b0 ; ReLU   (split-dot avoids an in-kernel concat)
    d = (jnp.dot(z, w_ref[DEC_W0Z_R:DEC_W0Z_R + LATENT, 0:HIDDEN],
                 preferred_element_type=jnp.float32)
         + jnp.dot(c, w_ref[DEC_W0C_R:DEC_W0C_R + C_SIZE, 0:HIDDEN],
                   preferred_element_type=jnp.float32)
         + w_ref[DEC_B0_R:DEC_B0_R + 1, 0:HIDDEN])
    d = jnp.maximum(d, 0.0)

    # L1: Linear (no activation)
    recon = jnp.dot(d, w_ref[DEC_W1_R:DEC_W1_R + HIDDEN, 0:X_SIZE],
                    preferred_element_type=jnp.float32)
    recon = recon + w_ref[DEC_B1_R:DEC_B1_R + 1, 0:X_SIZE]

    # ------------- lane-dense packed output -------------
    out_ref[:, OUT_MEAN_OFF:OUT_MEAN_OFF + LATENT] = means
    out_ref[:, OUT_LV_OFF:OUT_LV_OFF + LATENT] = log_var
    out_ref[:, OUT_Z_OFF:OUT_Z_OFF + LATENT] = z
    out_ref[:, OUT_RECON_OFF:OUT_RECON_OFF + X_SIZE] = recon
    out_ref[:, OUT_PAD_OFF:LANES] = jnp.zeros((tb, LANES - OUT_PAD_OFF), jnp.float32)


# -------------------------------- wrapper -----------------------------------
def cvae_forward(x, c, eps, param_slab, *, tile_b=TILE_B):
    b = x.shape[0]
    assert b % tile_b == 0, "batch must be a multiple of tile_b"

    # Pack x / c / eps into one lane-dense [B, 128] operand (single input DMA).
    pad = jnp.zeros((b, LANES - (IN_EPS_OFF + LATENT)), jnp.float32)
    packed_in = jnp.concatenate([x, c, eps, pad], axis=-1)

    out = pl.pallas_call(
        cvae_kernel,
        out_shape=jax.ShapeDtypeStruct((b, LANES), jnp.float32),
        grid_spec=pltpu.PrefetchScalarGridSpec(
            num_scalar_prefetch=0,
            grid=(b // tile_b,),
            in_specs=[
                pl.BlockSpec((tile_b, LANES), lambda i: (i, 0)),     # packed inputs
                pl.BlockSpec((SLAB_ROWS, LANES), lambda i: (0, 0)),  # resident weights
            ],
            out_specs=pl.BlockSpec((tile_b, LANES), lambda i: (i, 0)),
        ),
        compiler_params=pltpu.CompilerParams(
            dimension_semantics=("parallel",),       # shards batch across v7x's 2 TCs
            vmem_limit_bytes=16 * 1024 * 1024,
        ),
    )(packed_in, param_slab)

    means = out[:, OUT_MEAN_OFF:OUT_MEAN_OFF + LATENT]
    log_var = out[:, OUT_LV_OFF:OUT_LV_OFF + LATENT]
    z = out[:, OUT_Z_OFF:OUT_Z_OFF + LATENT]
    recon = out[:, OUT_RECON_OFF:OUT_RECON_OFF + X_SIZE]
    return recon, means, log_var, z


# --------------------------- params (synthetic) -----------------------------
def init_params(key):
    """Deterministic synthetic init matching nn.Linear shapes, stored as (in, out)."""
    ks = jax.random.split(key, 6)

    def lin(k, fan_in, fan_out):
        kw, kb = jax.random.split(k)
        s = 1.0 / jnp.sqrt(fan_in)
        w = jax.random.uniform(kw, (fan_in, fan_out), jnp.float32, -s, s)
        b = jax.random.uniform(kb, (1, fan_out), jnp.float32, -s, s)
        return w, b

    p = {}
    p["enc_w0"], p["enc_b0"] = lin(ks[0], XC, HIDDEN)                 # Linear(24, 32)
    p["enc_w1"], p["enc_b1"] = lin(ks[1], HIDDEN, LATENT)             # Linear(32, 32)
    p["mean_w"], p["mean_b"] = lin(ks[2], LATENT, LATENT)             # Linear(32, 32)
    p["lv_w"], p["lv_b"] = lin(ks[3], LATENT, LATENT)                 # Linear(32, 32)
    p["dec_w0"], p["dec_b0"] = lin(ks[4], LATENT + C_SIZE, HIDDEN)    # Linear(40, 32)
    p["dec_w1"], p["dec_b1"] = lin(ks[5], HIDDEN, X_SIZE)             # Linear(32, 16)
    return p


def pack_param_slab(p):
    """Pack all weights/biases into one sublane-aligned (200, 128) f32 slab."""
    slab = jnp.zeros((SLAB_ROWS, LANES), jnp.float32)

    def put(s, row, a):
        return s.at[row:row + a.shape[0], 0:a.shape[1]].set(a)

    slab = put(slab, ENC_W0_R, p["enc_w0"])
    slab = put(slab, ENC_B0_R, p["enc_b0"])
    slab = put(slab, ENC_W1_R, p["enc_w1"])
    slab = put(slab, ENC_B1_R, p["enc_b1"])
    slab = put(slab, HEAD_W_R, jnp.concatenate([p["mean_w"], p["lv_w"]], axis=1))
    slab = put(slab, HEAD_B_R, jnp.concatenate([p["mean_b"], p["lv_b"]], axis=1))
    slab = put(slab, DEC_W0Z_R, p["dec_w0"][:LATENT])
    slab = put(slab, DEC_W0C_R, p["dec_w0"][LATENT:])
    slab = put(slab, DEC_B0_R, p["dec_b0"])
    slab = put(slab, DEC_W1_R, p["dec_w1"])
    slab = put(slab, DEC_B1_R, p["dec_b1"])
    return slab


# ------------------------------ JAX reference --------------------------------
def reference_forward(x, c, eps, p):
    """Pure-JAX mirror of the PyTorch forward for correctness checking."""
    h = jnp.maximum(jnp.concatenate([x, c], -1) @ p["enc_w0"] + p["enc_b0"], 0.0)
    h = jnp.maximum(h @ p["enc_w1"] + p["enc_b1"], 0.0)
    means = h @ p["mean_w"] + p["mean_b"]
    log_var = jnp.maximum(h @ p["lv_w"] + p["lv_b"], 0.0)   # F.relu per reference
    z = eps * jnp.exp(0.5 * log_var) + means
    d = jnp.maximum(jnp.concatenate([z, c], -1) @ p["dec_w0"] + p["dec_b0"], 0.0)
    recon = d @ p["dec_w1"] + p["dec_b1"]
    return recon, means, log_var, z


# ---------------------------------- main -------------------------------------
if __name__ == "__main__":
    key = jax.random.PRNGKey(0)
    k_x, k_c, k_eps, k_p = jax.random.split(key, 4)

    x = jax.random.normal(k_x, (BATCH, X_SIZE), jnp.float32)
    c = jax.random.normal(k_c, (BATCH, C_SIZE), jnp.float32)
    # torch.randn(eps) inside forward is replaced by a deterministic jax.random
    # draw supplied per call (same distributional semantics; don't reuse eps).
    eps = jax.random.normal(k_eps, (BATCH, LATENT), jnp.float32)

    params = init_params(k_p)
    slab = pack_param_slab(params)

    recon_x, means, log_var, z = jax.block_until_ready(
        cvae_forward(x, c, eps, slab))

    ref = reference_forward(x, c, eps, params)
    for name, got, want in zip(("recon_x", "means", "log_var", "z"),
                               (recon_x, means, log_var, z), ref):
        assert got.shape == want.shape, f"{name} shape mismatch"
        assert jnp.allclose(got, want, atol=1e-4, rtol=1e-4), f"{name} mismatch vs reference"

    print("KERNEL_OK")
</pallas_src>

<mosaic_0001>
module attributes {stable_mosaic.version = 11 : i64} {
  func.func @cvae_kernel(%arg0: i32, %arg1: memref<128x128xf32, #tpu.memory_space<vmem>>, %arg2: memref<200x128xf32, #tpu.memory_space<vmem>>, %arg3: memref<128x128xf32, #tpu.memory_space<vmem>>) attributes {dimension_semantics = [#tpu.dimension_semantics<parallel>], iteration_bounds = array<i64: 2>, scalar_prefetch = 0 : i64, scratch_operands = 0 : i64, tpu.core_type = #tpu.core_type<tc>, window_params = [{transform_indices = @transform_0, window_bounds = array<i64: 128, 128>}, {pipeline_mode = #tpu.pipeline_mode<synchronous>, transform_indices = @transform_1, window_bounds = array<i64: 200, 128>}, {transform_indices = @transform_2, window_bounds = array<i64: 128, 128>}]} {
    %c0 = arith.constant 0 : index
    %c0_0 = arith.constant 0 : index
    %0 = vector.load %arg1[%c0, %c0_0] : memref<128x128xf32, #tpu.memory_space<vmem>>, vector<128x24xf32>
    %c0_1 = arith.constant 0 : index
    %c16 = arith.constant 16 : index
    %1 = vector.load %arg1[%c0_1, %c16] : memref<128x128xf32, #tpu.memory_space<vmem>>, vector<128x8xf32>
    %c0_2 = arith.constant 0 : index
    %c24 = arith.constant 24 : index
    %2 = vector.load %arg1[%c0_2, %c24] : memref<128x128xf32, #tpu.memory_space<vmem>>, vector<128x32xf32>
    %c0_3 = arith.constant 0 : index
    %c0_4 = arith.constant 0 : index
    %3 = vector.load %arg2[%c0_3, %c0_4] : memref<200x128xf32, #tpu.memory_space<vmem>>, vector<24x32xf32>
    %cst = arith.constant dense<0.000000e+00> : vector<128x32xf32>
    %4 = tpu.matmul %0, %3, %cst {dimension_numbers = #tpu.dot_dimension_numbers<[1], [0], [0], [1], [0, 0, 1, 1], [], []>} : vector<128x24xf32>, vector<24x32xf32>, vector<128x32xf32> -> vector<128x32xf32>
    %c24_5 = arith.constant 24 : index
    %c0_6 = arith.constant 0 : index
    %5 = vector.load %arg2[%c24_5, %c0_6] : memref<200x128xf32, #tpu.memory_space<vmem>>, vector<1x32xf32>
    %6 = vector.broadcast %5 : vector<1x32xf32> to vector<128x32xf32>
    %7 = arith.addf %4, %6 : vector<128x32xf32>
    %cst_7 = arith.constant 0.000000e+00 : f32
    %8 = vector.broadcast %cst_7 : f32 to vector<128x32xf32>
    %9 = arith.maximumf %7, %8 : vector<128x32xf32>
    %c32 = arith.constant 32 : index
    %c0_8 = arith.constant 0 : index
    %10 = vector.load %arg2[%c32, %c0_8] : memref<200x128xf32, #tpu.memory_space<vmem>>, vector<32x32xf32>
    %cst_9 = arith.constant dense<0.000000e+00> : vector<128x32xf32>
    %11 = tpu.matmul %9, %10, %cst_9 {dimension_numbers = #tpu.dot_dimension_numbers<[1], [0], [0], [1], [0, 0, 1, 1], [], []>} : vector<128x32xf32>, vector<32x32xf32>, vector<128x32xf32> -> vector<128x32xf32>
    %c64 = arith.constant 64 : index
    %c0_10 = arith.constant 0 : index
    %12 = vector.load %arg2[%c64, %c0_10] : memref<200x128xf32, #tpu.memory_space<vmem>>, vector<1x32xf32>
    %13 = vector.broadcast %12 : vector<1x32xf32> to vector<128x32xf32>
    %14 = arith.addf %11, %13 : vector<128x32xf32>
    %cst_11 = arith.constant 0.000000e+00 : f32
    %15 = vector.broadcast %cst_11 : f32 to vector<128x32xf32>
    %16 = arith.maximumf %14, %15 : vector<128x32xf32>
    %c72 = arith.constant 72 : index
    %c0_12 = arith.constant 0 : index
    %17 = vector.load %arg2[%c72, %c0_12] : memref<200x128xf32, #tpu.memory_space<vmem>>, vector<32x64xf32>
    %cst_13 = arith.constant dense<0.000000e+00> : vector<128x64xf32>
    %18 = tpu.matmul %16, %17, %cst_13 {dimension_numbers = #tpu.dot_dimension_numbers<[1], [0], [0], [1], [0, 0, 1, 1], [], []>} : vector<128x32xf32>, vector<32x64xf32>, vector<128x64xf32> -> vector<128x64xf32>
    %c104 = arith.constant 104 : index
    %c0_14 = arith.constant 0 : index
    %19 = vector.load %arg2[%c104, %c0_14] : memref<200x128xf32, #tpu.memory_space<vmem>>, vector<1x64xf32>
    %20 = vector.broadcast %19 : vector<1x64xf32> to vector<128x64xf32>
    %21 = arith.addf %18, %20 : vector<128x64xf32>
    %22 = vector.extract_strided_slice %21 {offsets = [0, 0], sizes = [128, 32], strides = [1, 1]} : vector<128x64xf32> to vector<128x32xf32>
    %23 = vector.extract_strided_slice %21 {offsets = [0, 32], sizes = [128, 32], strides = [1, 1]} : vector<128x64xf32> to vector<128x32xf32>
    %cst_15 = arith.constant 0.000000e+00 : f32
    %24 = vector.broadcast %cst_15 : f32 to vector<128x32xf32>
    %25 = arith.maximumf %23, %24 : vector<128x32xf32>
    %cst_16 = arith.constant 5.000000e-01 : f32
    %26 = vector.broadcast %cst_16 : f32 to vector<128x32xf32>
    %27 = arith.mulf %26, %25 : vector<128x32xf32>
    %28 = math.exp %27 : vector<128x32xf32>
    %29 = arith.mulf %2, %28 : vector<128x32xf32>
    %30 = arith.addf %29, %22 : vector<128x32xf32>
    %c112 = arith.constant 112 : index
    %c0_17 = arith.constant 0 : index
    %31 = vector.load %arg2[%c112, %c0_17] : memref<200x128xf32, #tpu.memory_space<vmem>>, vector<32x32xf32>
    %cst_18 = arith.constant dense<0.000000e+00> : vector<128x32xf32>
    %32 = tpu.matmul %30, %31, %cst_18 {dimension_numbers = #tpu.dot_dimension_numbers<[1], [0], [0], [1], [0, 0, 1, 1], [], []>} : vector<128x32xf32>, vector<32x32xf32>, vector<128x32xf32> -> vector<128x32xf32>
    %c144 = arith.constant 144 : index
    %c0_19 = arith.constant 0 : index
    %33 = vector.load %arg2[%c144, %c0_19] : memref<200x128xf32, #tpu.memory_space<vmem>>, vector<8x32xf32>
    %cst_20 = arith.constant dense<0.000000e+00> : vector<128x32xf32>
    %34 = tpu.matmul %1, %33, %cst_20 {dimension_numbers = #tpu.dot_dimension_numbers<[1], [0], [0], [1], [0, 0, 1, 1], [], []>} : vector<128x8xf32>, vector<8x32xf32>, vector<128x32xf32> -> vector<128x32xf32>
    %35 = arith.addf %32, %34 : vector<128x32xf32>
    %c152 = arith.constant 152 : index
    %c0_21 = arith.constant 0 : index
    %36 = vector.load %arg2[%c152, %c0_21] : memref<200x128xf32, #tpu.memory_space<vmem>>, vector<1x32xf32>
    %37 = vector.broadcast %36 : vector<1x32xf32> to vector<128x32xf32>
    %38 = arith.addf %35, %37 : vector<128x32xf32>
    %cst_22 = arith.constant 0.000000e+00 : f32
    %39 = vector.broadcast %cst_22 : f32 to vector<128x32xf32>
    %40 = arith.maximumf %38, %39 : vector<128x32xf32>
    %c160 = arith.constant 160 : index
    %c0_23 = arith.constant 0 : index
    %41 = vector.load %arg2[%c160, %c0_23] : memref<200x128xf32, #tpu.memory_space<vmem>>, vector<32x16xf32>
    %cst_24 = arith.constant dense<0.000000e+00> : vector<128x16xf32>
    %42 = tpu.matmul %40, %41, %cst_24 {dimension_numbers = #tpu.dot_dimension_numbers<[1], [0], [0], [1], [0, 0, 1, 1], [], []>} : vector<128x32xf32>, vector<32x16xf32>, vector<128x16xf32> -> vector<128x16xf32>
    %c192 = arith.constant 192 : index
    %c0_25 = arith.constant 0 : index
    %43 = vector.load %arg2[%c192, %c0_25] : memref<200x128xf32, #tpu.memory_space<vmem>>, vector<1x16xf32>
    %44 = vector.broadcast %43 : vector<1x16xf32> to vector<128x16xf32>
    %45 = arith.addf %42, %44 : vector<128x16xf32>
    %c0_26 = arith.constant 0 : index
    %c0_27 = arith.constant 0 : index
    %46 = vector.load %arg3[%c0_26, %c0_27] : memref<128x128xf32, #tpu.memory_space<vmem>>, vector<128x32xf32>
    tpu.vector_store %arg3[%c0_26, %c0_27], %22 {strides = array<i32>} : memref<128x128xf32, #tpu.memory_space<vmem>>, vector<128x32xf32>,
    %c0_28 = arith.constant 0 : index
    %c32_29 = arith.constant 32 : index
    %47 = vector.load %arg3[%c0_28, %c32_29] : memref<128x128xf32, #tpu.memory_space<vmem>>, vector<128x32xf32>
    tpu.vector_store %arg3[%c0_28, %c32_29], %25 {strides = array<i32>} : memref<128x128xf32, #tpu.memory_space<vmem>>, vector<128x32xf32>,
    %c0_30 = arith.constant 0 : index
    %c64_31 = arith.constant 64 : index
    %48 = vector.load %arg3[%c0_30, %c64_31] : memref<128x128xf32, #tpu.memory_space<vmem>>, vector<128x32xf32>
    tpu.vector_store %arg3[%c0_30, %c64_31], %30 {strides = array<i32>} : memref<128x128xf32, #tpu.memory_space<vmem>>, vector<128x32xf32>,
    %c0_32 = arith.constant 0 : index
    %c96 = arith.constant 96 : index
    %49 = vector.load %arg3[%c0_32, %c96] : memref<128x128xf32, #tpu.memory_space<vmem>>, vector<128x16xf32>
    tpu.vector_store %arg3[%c0_32, %c96], %45 {strides = array<i32>} : memref<128x128xf32, #tpu.memory_space<vmem>>, vector<128x16xf32>,
    %cst_33 = arith.constant 0.000000e+00 : f32
    %50 = vector.broadcast %cst_33 : f32 to vector<128x16xf32>
    %c0_34 = arith.constant 0 : index
    %c112_35 = arith.constant 112 : index
    %51 = vector.load %arg3[%c0_34, %c112_35] : memref<128x128xf32, #tpu.memory_space<vmem>>, vector<128x16xf32>
    tpu.vector_store %arg3[%c0_34, %c112_35], %50 {strides = array<i32>} : memref<128x128xf32, #tpu.memory_space<vmem>>, vector<128x16xf32>,
    return
  }
  func.func @transform_0(%arg0: i32) -> (i32, i32) {
    %c0_i32 = arith.constant 0 : i32
    %c0_i32_0 = arith.constant 0 : i32
    return %arg0, %c0_i32 : i32, i32
  }
  func.func @transform_1(%arg0: i32) -> (i32, i32) {
    %c0_i32 = arith.constant 0 : i32
    %c0_i32_0 = arith.constant 0 : i32
    %c0_i32_1 = arith.constant 0 : i32
    return %c0_i32, %c0_i32_0 : i32, i32
  }
  func.func @transform_2(%arg0: i32) -> (i32, i32) {
    %c0_i32 = arith.constant 0 : i32
    %c0_i32_0 = arith.constant 0 : i32
    return %arg0, %c0_i32 : i32, i32
  }
}

</mosaic_0001>

<llo_original>
// kernel: tpu_custom_call.1
$region0: #{tpu_custom_call.1}
  #allocation0 [shape = 'u32[]', space=smem, size = 0x4, offset = 0x4, fixed_abs, tag = 'smem constant byte address 0x4 - core index']
  #allocation1 [shape = 'u32[144,128]{1,0:T(1,128)}', space=vmem, size = 0x12000, scoped, tag = 'internal scratch']
  %s0 = inlined_call_operand.hbm [shape: f32[256,128], index: 0, kind: input, shape index: {}]
  %s1 = inlined_call_operand.hbm [shape: f32[200,128], index: 1, kind: input, shape index: {}]
  %s2 = inlined_call_operand.hbm [shape: f32[256,128], index: 2, kind: output, shape index: {}]
  %s3 = sld [smem:[#allocation0]]
  $region49: #{tpu_custom_call.1} parent=0
    _
  %s5 = ssub.s32 1, %s3
  %s6 = scalar_select 0, %s5, %s3
  $region1: #{tpu_custom_call.1} parent=0
    #allocation2 [shape = 'u8[131072]{0}', space=vmem, size = 0x20000, scoped, tag = 'input window, operand 0']
    #allocation3 [shape = 's32[2]{0}', space=sflag, size = 0x8, scoped, tag = 'scoped memory for tpu_custom_call.1']
    #allocation4 [shape = 's32[2]{0}', space=sflag, size = 0x8, scoped, tag = 'scoped memory for tpu_custom_call.1']
    #allocation5 [shape = 'u8[102400]{0}', space=vmem, size = 0x19000, scoped, tag = 'input window, operand 1, single buffered']
    #allocation6 [shape = 's32[1]{0}', space=sflag, size = 0x4, scoped, tag = 'scoped memory for tpu_custom_call.1']
    #allocation7 [shape = 'u8[131072]{0}', space=vmem, size = 0x20000, scoped, tag = 'output window, operand 0']
    %7 = vsyncpa [#allocation3], 0
    %s8 = scalar_lea.sflag [#allocation3], 1
    %9 = vsyncpa %s8, 0
    %10 = vsyncpa [#allocation6], 0
    %11 = vsyncpa [#allocation4], 0
    %s12 = scalar_lea.sflag [#allocation4], 1
    %13 = vsyncpa %s12, 0
    loop: start=0, step=1, limit=4
    $region2: #{tpu_custom_call.1} parent=1 // loop_pre_header
      _
    $region3: #{tpu_custom_call.1} parent=1 // loop_header
      %s15 = sphi 0, %s19
      %p16 = scmp.ge.s32.totalorder %s15, 4
      %s25 = sphi 0, %s27
      %s28 = sphi 0, %s25
      %s29 = sphi 0, %s28
      %s45 = sphi 0, %s29
      %s49 = sphi 0, %s49
      %s51 = sphi 0, %s49
      %s52 = sphi 0, %s51
      %s66 = sphi 0, %s52
      %s72 = sphi 0, %s74
      %s75 = sphi 0, %s72
      %s76 = sphi 0, %s75
      %s92 = sphi 0, %s76
    $region4: #{tpu_custom_call.1} parent=1 // loop_header_branch
      %18 = sbr.rel (%p16) target = $region8
    $region5: #{tpu_custom_call.1} parent=1 // loop_body
      %s20 = ssub.s32 %s15, 1
      %s21 = ssub.s32 %s15, 2
      %s22 = sadd.s32 %s15, 1
      %s23 = ssub.s32 %s15, %s22
      %p24 = scmp.eq.s32.totalorder %s23, 0
      %s26 = sadd.s32 %s25, 1
      %s27 = scalar_select %p24, %s25, %s26
      %p30 = pneg %p24
      %p31 = scmp.eq.s32.totalorder %s15, 1
      %p32 = por %p30, %p31
      %p33 = scmp.ne.s32.totalorder %s25, %s28
      %p34 = scmp.eq.s32.totalorder %s15, 0
      %p35 = por %p33, %p34
      %p36 = scmp.ne.s32.totalorder %s25, %s28
      %p37 = scmp.eq.s32.totalorder %s20, 1
      %p38 = por %p36, %p37
      %p39 = scmp.ne.s32.totalorder %s28, %s29
      %p40 = scmp.eq.s32.totalorder %s20, 0
      %p41 = por %p39, %p40
      %p42 = scmp.ne.s32.totalorder %s28, %s29
      %p43 = scmp.eq.s32.totalorder %s21, 1
      %p44 = por %p42, %p43
      %p46 = scmp.ne.s32.totalorder %s29, %s45
      %p47 = scmp.eq.s32.totalorder %s21, 0
      %p48 = por %p46, %p47
      %s50 = sadd.s32 %s49, 1
      %p53 = scmp.eq.s32.totalorder %s15, 1
      %p54 = scmp.ne.s32.totalorder %s49, %s51
      %p55 = scmp.eq.s32.totalorder %s15, 0
      %p56 = por %p54, %p55
      %p57 = scmp.ne.s32.totalorder %s49, %s51
      %p58 = scmp.eq.s32.totalorder %s20, 1
      %p59 = por %p57, %p58
      %p60 = scmp.ne.s32.totalorder %s51, %s52
      %p61 = scmp.eq.s32.totalorder %s20, 0
      %p62 = por %p60, %p61
      %p63 = scmp.ne.s32.totalorder %s51, %s52
      %p64 = scmp.eq.s32.totalorder %s21, 1
      %p65 = por %p63, %p64
      %p67 = scmp.ne.s32.totalorder %s52, %s66
      %p68 = scmp.eq.s32.totalorder %s21, 0
      %p69 = por %p67, %p68
      %s70 = ssub.s32 %s15, %s22
      %p71 = scmp.eq.s32.totalorder %s70, 0
      %s73 = sadd.s32 %s72, 1
      %s74 = scalar_select %p71, %s72, %s73
      %p77 = pneg %p71
      %p78 = scmp.eq.s32.totalorder %s15, 1
      %p79 = por %p77, %p78
      %p80 = scmp.ne.s32.totalorder %s72, %s75
      %p81 = scmp.eq.s32.totalorder %s15, 0
      %p82 = por %p80, %p81
      %p83 = scmp.ne.s32.totalorder %s72, %s75
      %p84 = scmp.eq.s32.totalorder %s20, 1
      %p85 = por %p83, %p84
      %p86 = scmp.ne.s32.totalorder %s75, %s76
      %p87 = scmp.eq.s32.totalorder %s20, 0
      %p88 = por %p86, %p87
      %p89 = scmp.ne.s32.totalorder %s75, %s76
      %p90 = scmp.eq.s32.totalorder %s21, 1
      %p91 = por %p89, %p90
      %p93 = scmp.ne.s32.totalorder %s76, %s92
      %p94 = scmp.eq.s32.totalorder %s21, 0
      %p95 = por %p93, %p94
      %p96 = scmp.le.s32.totalorder 1, %s15
      %p97 = scmp.lt.s32.totalorder %s15, 3
      %p98 = pnand %p96, %p97
      %p99 = pneg %p98
      // Predicated region
      $region9: #{tpu_custom_call.1} parent=5 // pred_check
        _
      $region10: #{tpu_custom_call.1} parent=5 // pred_check_branch
        %101 = sbr.rel (%p98) target = $region12
      $region11: #{tpu_custom_call.1} parent=5 // pred_region
        %s102 = ssub.s32 %s15, 1
        // Predicated region
        $region13: #{tpu_custom_call.1} parent=11 // pred_check
          %p103 = pneg %p62
        $region14: #{tpu_custom_call.1} parent=11 // pred_check_branch
          %105 = sbr.rel (%p103) target = $region16
        $region15: #{tpu_custom_call.1} parent=11 // pred_region
          %s107 = ssub.s32 3200, 3200
          %108 = vsyncadd [#allocation6], %s107
          %s109 = sshll.u32 [#allocation5], 4
          %s110 = int_to_ptr.vmem [resolvable:$true] %s109
          %115 = dma.hbm_to_vmem [thread:$0]  %s1, 3200, %s110, [#allocation6], 128, 128, 8
        $region16: #{tpu_custom_call.1} parent=11 // pred_fallthru
          _
      $region12: #{tpu_custom_call.1} parent=5 // pred_fallthru
        _
      %p116 = scmp.lt.s32.totalorder %s15, 2
      // Predicated region
      $region17: #{tpu_custom_call.1} parent=5 // pred_check
        %p117 = pneg %p116
      $region18: #{tpu_custom_call.1} parent=5 // pred_check_branch
        %119 = sbr.rel (%p117) target = $region20
      $region19: #{tpu_custom_call.1} parent=5 // pred_region
        // Predicated region
        $region21: #{tpu_custom_call.1} parent=19 // pred_check
          %p120 = pneg %p35
        $region22: #{tpu_custom_call.1} parent=19 // pred_check_branch
          %122 = sbr.rel (%p120) target = $region24
        $region23: #{tpu_custom_call.1} parent=19 // pred_region
          %s123 = sand.u32 %s25, 1
          %s124 = scalar_lea.sflag [#allocation3], %s123
          %s125 = sand.u32 %s25, 1
          %s126 = smul.addr %s125, 128
          %s127 = scalar_lea.vmem [#allocation2], %s126
          %s128 = smul.u32 16, %s15
          %s130 = ssub.s32 2048, 2048
          %131 = vsyncadd %s124, %s130
          %s132 = smul.addr %s128, 128
          %s133 = scalar_lea.hbm %s0, %s132
          %s134 = sshll.u32 %s127, 4
          %s135 = int_to_ptr.vmem [resolvable:$true] %s134
          %140 = dma.hbm_to_vmem [thread:$0]  %s133, 2048, %s135, %s124, 128, 128, 8
        $region24: #{tpu_custom_call.1} parent=19 // pred_fallthru
          _
      $region20: #{tpu_custom_call.1} parent=5 // pred_fallthru
        _
      %p141 = scmp.le.s32.totalorder 1, %s15
      %p142 = scmp.lt.s32.totalorder %s15, 3
      %p143 = pnand %p141, %p142
      %p144 = pneg %p143
      // Predicated region
      $region25: #{tpu_custom_call.1} parent=5 // pred_check
        _
      $region26: #{tpu_custom_call.1} parent=5 // pred_check_branch
        %146 = sbr.rel (%p143) target = $region28
      $region27: #{tpu_custom_call.1} parent=5 // pred_region
        %s147 = ssub.s32 %s15, 1
        %s148 = sand.u32 %s28, 1
        %s149 = scalar_lea.sflag [#allocation3], %s148
        %s150 = sand.u32 %s28, 1
        %s151 = smul.addr %s150, 128
        %s152 = scalar_lea.vmem [#allocation2], %s151
        // Predicated region
        $region29: #{tpu_custom_call.1} parent=27 // pred_check
          %p153 = pneg %p41
        $region30: #{tpu_custom_call.1} parent=27 // pred_check_branch
          %155 = sbr.rel (%p153) target = $region32
        $region31: #{tpu_custom_call.1} parent=27 // pred_region
          %156 = dma.done %s149, 2048
        $region32: #{tpu_custom_call.1} parent=27 // pred_fallthru
          _
        // Predicated region
        $region33: #{tpu_custom_call.1} parent=27 // pred_check
          %p157 = pneg %p62
        $region34: #{tpu_custom_call.1} parent=27 // pred_check_branch
          %159 = sbr.rel (%p157) target = $region36
        $region35: #{tpu_custom_call.1} parent=27 // pred_region
          %160 = dma.done [#allocation6], 3200
        $region36: #{tpu_custom_call.1} parent=27 // pred_fallthru
          _
        %s161 = sand.u32 %s28, 1
        %s162 = scalar_lea.sflag [#allocation3], %s161
        %s163 = sand.u32 %s28, 1
        %s164 = smul.addr %s163, 128
        %s165 = scalar_lea.vmem [#allocation2], %s164
        %p166 = pneg %p41
        %p167 = pneg %p38
        %p168 = pneg %p62
        %p169 = pneg %p59
        %p170 = pneg %p88
        %p171 = pneg %p85
        %s172 = sand.u32 %s75, 1
        %s173 = scalar_lea.sflag [#allocation4], %s172
        %s174 = sand.u32 %s75, 1
        %s175 = smul.addr %s174, 128
        %s176 = scalar_lea.vmem [#allocation7], %s175
        %s177 = smul.u32 16, %s20
        %s178 = smul.u32 16, %s20
        %v179 = vld [vmem:[%s152] sm:$0xff]
        %v180 = vld [vmem:[%s152 + $0x8] sm:$0xff]
        %v181 = vld [vmem:[%s152 + $0x10] sm:$0xff]
        %v182 = vld [vmem:[%s152 + $0x18] sm:$0xff]
        %v183 = vld [vmem:[%s152 + $0x20] sm:$0xff]
        %v184 = vld [vmem:[%s152 + $0x28] sm:$0xff]
        %v185 = vld [vmem:[%s152 + $0x30] sm:$0xff]
        %v186 = vld [vmem:[%s152 + $0x38] sm:$0xff]
        %v187 = vld [vmem:[%s152 + $0x40] sm:$0xff]
        %v188 = vld [vmem:[%s152 + $0x48] sm:$0xff]
        %v189 = vld [vmem:[%s152 + $0x50] sm:$0xff]
        %v190 = vld [vmem:[%s152 + $0x58] sm:$0xff]
        %v191 = vld [vmem:[%s152 + $0x60] sm:$0xff]
        %v192 = vld [vmem:[%s152 + $0x68] sm:$0xff]
        %v193 = vld [vmem:[%s152 + $0x70] sm:$0xff]
        %v194 = vld [vmem:[%s152 + $0x78] sm:$0xff]
        %v195 = vld [vmem:[#allocation5] sm:$0xff]
        %v196 = vld [vmem:[#allocation5 + $0x8] sm:$0xff]
        %v197 = vld [vmem:[#allocation5 + $0x10] sm:$0xff]
        %v198 = vld [vmem:[#allocation5 + $0x18] sm:$0x1]
        %v199 = vlaneseq
        %v200 = vshrl.u32 %v199, 7
        %v201 = vsub.s32 0, %v200
        %v202 = vrot.slane %v198, %v201
        %vm203 = vcmask 195584
        %v205 = vsel %vm203, %v179, 0
        %v208 = vsel %vm203, %v180, 0
        %v211 = vsel %vm203, %v181, 0
        %v214 = vsel %vm203, %v182, 0
        %v217 = vsel %vm203, %v183, 0
        %v220 = vsel %vm203, %v184, 0
        %v223 = vsel %vm203, %v185, 0
        %v226 = vsel %vm203, %v186, 0
        %v229 = vsel %vm203, %v187, 0
        %v232 = vsel %vm203, %v188, 0
        %v235 = vsel %vm203, %v189, 0
        %v238 = vsel %vm203, %v190, 0
        %v241 = vsel %vm203, %v191, 0
        %v244 = vsel %vm203, %v192, 0
        %v247 = vsel %vm203, %v193, 0
        %v250 = vsel %vm203, %v194, 0
        %252 = vmatprep.subr.mxu0 0.0
        %253 = vmatpush1.msra.mxu0 %v195
        %254 = vmatprep.subr.mxu0 0.0
        %255 = vmatpush1.msra.mxu0 %v196
        %256 = vmatprep.subr.mxu0 0.0
        %257 = vmatpush1.msra.mxu0 %v197
        %258 = vmatprep.subr.mxu0 0.0
        %259 = vmatpush1.msra.mxu0 0.0
        %260 = vmatprep.subr.mxu0 0.0
        %261 = vmatpush1.msra.mxu0 0.0
        %262 = vmatprep.subr.mxu0 0.0
        %263 = vmatpush1.msra.mxu0 0.0
        %264 = vmatprep.subr.mxu0 0.0
        %265 = vmatpush1.msra.mxu0 0.0
        %266 = vmatprep.subr.mxu0 0.0
        %267 = vmatpush1.msra.mxu0 0.0
        %268 = vmatprep.subr.mxu0 0.0
        %269 = vmatpush1.msra.mxu0 0.0
        %270 = vmatprep.subr.mxu0 0.0
        %271 = vmatpush1.msra.mxu0 0.0
        %272 = vmatprep.subr.mxu0 0.0
        %273 = vmatpush1.msra.mxu0 0.0
        %274 = vmatprep.subr.mxu0 0.0
        %275 = vmatpush1.msra.mxu0 0.0
        %276 = vmatprep.subr.mxu0 0.0
        %277 = vmatpush1.msra.mxu0 0.0
        %278 = vmatprep.subr.mxu0 0.0
        %279 = vmatpush1.msra.mxu0 0.0
        %280 = vmatprep.subr.mxu0 0.0
        %281 = vmatpush1.msra.mxu0 0.0
        %282 = vmatprep.subr.mxu0 0.0
        %283 = vmatpush1.msra.mxu0 0.0
        %284 = vmatprep.subr.mxu0 0.0
        %285 = vmatpush1.msra.mxu0 0.0
        %286 = vmatprep.subr.mxu0 0.0
        %287 = vmatpush1.msra.mxu0 0.0
        %288 = vmatprep.subr.mxu0 0.0
        %289 = vmatpush1.msra.mxu0 0.0
        %290 = vmatprep.subr.mxu0 0.0
        %291 = vmatpush1.msra.mxu0 0.0
        %292 = vmatprep.subr.mxu0 0.0
        %293 = vmatpush1.msra.mxu0 0.0
        %294 = vmatprep.subr.mxu0 0.0
        %295 = vmatpush1.msra.mxu0 0.0
        %296 = vmatprep.subr.mxu0 0.0
        %297 = vmatpush1.msra.mxu0 0.0
        %298 = vmatprep.subr.mxu0 0.0
        %299 = vmatpush1.msra.mxu0 0.0
        %300 = vmatprep.subr.mxu0 0.0
        %301 = vmatpush1.msra.mxu0 0.0
        %302 = vmatprep.subr.mxu0 0.0
        %303 = vmatpush1.msra.mxu0 0.0
        %304 = vmatprep.subr.mxu0 0.0
        %305 = vmatpush1.msra.mxu0 0.0
        %306 = vmatprep.subr.mxu0 0.0
        %307 = vmatpush1.msra.mxu0 0.0
        %308 = vmatprep.subr.mxu0 0.0
        %309 = vmatpush1.msra.mxu0 0.0
        %310 = vmatprep.subr.mxu0 0.0
        %311 = vmatpush1.msra.mxu0 0.0
        %312 = vmatprep.subr.mxu0 0.0
        %313 = vmatpush1.msra.mxu0 0.0
        %314 = vmatprep.subr.mxu0 0.0
        %315 = vmatpush1.msra.mxu0 0.0
        %316 = vmatprep.mubr.f32.mxu0 0.0
        %317 = vmatmul.mubr.f32.gmra.mrb[0].mxu0 %v205
        %v318 = vpop.f32.mrb[0].mxu0
        %v319 = vadd.f32 %v202, %v318
        %v320 = vpop.f32.mrb[0].mxu0
        %321 = vmatprep.mubr.f32.mxu0 0.0
        %322 = vmatmul.mubr.f32.gmra.mrb[0].mxu0 %v208
        %v323 = vpop.f32.mrb[0].mxu0
        %v324 = vadd.f32 %v202, %v323
        %v325 = vpop.f32.mrb[0].mxu0
        %326 = vmatprep.mubr.f32.mxu0 0.0
        %327 = vmatmul.mubr.f32.gmra.mrb[0].mxu0 %v211
        %v328 = vpop.f32.mrb[0].mxu0
        %v329 = vadd.f32 %v202, %v328
        %v330 = vpop.f32.mrb[0].mxu0
        %331 = vmatprep.mubr.f32.mxu0 0.0
        %332 = vmatmul.mubr.f32.gmra.mrb[0].mxu0 %v214
        %v333 = vpop.f32.mrb[0].mxu0
        %v334 = vadd.f32 %v202, %v333
        %v335 = vpop.f32.mrb[0].mxu0
        %336 = vmatprep.mubr.f32.mxu0 0.0
        %337 = vmatmul.mubr.f32.gmra.mrb[0].mxu0 %v217
        %v338 = vpop.f32.mrb[0].mxu0
        %v339 = vadd.f32 %v202, %v338
        %v340 = vpop.f32.mrb[0].mxu0
        %341 = vmatprep.mubr.f32.mxu0 0.0
        %342 = vmatmul.mubr.f32.gmra.mrb[0].mxu0 %v220
        %v343 = vpop.f32.mrb[0].mxu0
        %v344 = vadd.f32 %v202, %v343
        %v345 = vpop.f32.mrb[0].mxu0
        %346 = vmatprep.mubr.f32.mxu0 0.0
        %347 = vmatmul.mubr.f32.gmra.mrb[0].mxu0 %v223
        %v348 = vpop.f32.mrb[0].mxu0
        %v349 = vadd.f32 %v202, %v348
        %v350 = vpop.f32.mrb[0].mxu0
        %351 = vmatprep.mubr.f32.mxu0 0.0
        %352 = vmatmul.mubr.f32.gmra.mrb[0].mxu0 %v226
        %v353 = vpop.f32.mrb[0].mxu0
        %v354 = vadd.f32 %v202, %v353
        %v355 = vpop.f32.mrb[0].mxu0
        %356 = vmatprep.mubr.f32.mxu0 0.0
        %357 = vmatmul.mubr.f32.gmra.mrb[0].mxu0 %v229
        %v358 = vpop.f32.mrb[0].mxu0
        %v359 = vadd.f32 %v202, %v358
        %v360 = vpop.f32.mrb[0].mxu0
        %361 = vmatprep.mubr.f32.mxu0 0.0
        %362 = vmatmul.mubr.f32.gmra.mrb[0].mxu0 %v232
        %v363 = vpop.f32.mrb[0].mxu0
        %v364 = vadd.f32 %v202, %v363
        %v365 = vpop.f32.mrb[0].mxu0
        %366 = vmatprep.mubr.f32.mxu0 0.0
        %367 = vmatmul.mubr.f32.gmra.mrb[0].mxu0 %v235
        %v368 = vpop.f32.mrb[0].mxu0
        %v369 = vadd.f32 %v202, %v368
        %v370 = vpop.f32.mrb[0].mxu0
        %371 = vmatprep.mubr.f32.mxu0 0.0
        %372 = vmatmul.mubr.f32.gmra.mrb[0].mxu0 %v238
        %v373 = vpop.f32.mrb[0].mxu0
        %v374 = vadd.f32 %v202, %v373
        %v375 = vpop.f32.mrb[0].mxu0
        %376 = vmatprep.mubr.f32.mxu0 0.0
        %377 = vmatmul.mubr.f32.gmra.mrb[0].mxu0 %v241
        %v378 = vpop.f32.mrb[0].mxu0
        %v379 = vadd.f32 %v202, %v378
        %v380 = vpop.f32.mrb[0].mxu0
        %381 = vmatprep.mubr.f32.mxu0 0.0
        %382 = vmatmul.mubr.f32.gmra.mrb[0].mxu0 %v244
        %v383 = vpop.f32.mrb[0].mxu0
        %v384 = vadd.f32 %v202, %v383
        %v385 = vpop.f32.mrb[0].mxu0
        %386 = vmatprep.mubr.f32.mxu0 0.0
        %387 = vmatmul.mubr.f32.gmra.mrb[0].mxu0 %v247
        %v388 = vpop.f32.mrb[0].mxu0
        %v389 = vadd.f32 %v202, %v388
        %v390 = vpop.f32.mrb[0].mxu0
        %391 = vmatprep.mubr.f32.mxu0 0.0
        %392 = vmatmul.mubr.f32.gmra.mrb[0].mxu0 %v250
        %v393 = vpop.f32.mrb[0].mxu0
        %v394 = vadd.f32 %v202, %v393
        %v395 = vpop.f32.mrb[0].mxu0
        %396 = vdwg.mxu0
        %v397 = vmax.f32 %v319, 0.0
        %v398 = vmax.f32 %v324, 0.0
        %v399 = vmax.f32 %v329, 0.0
        %v400 = vmax.f32 %v334, 0.0
        %v401 = vmax.f32 %v339, 0.0
        %v402 = vmax.f32 %v344, 0.0
        %v403 = vmax.f32 %v349, 0.0
        %v404 = vmax.f32 %v354, 0.0
        %v405 = vmax.f32 %v359, 0.0
        %v406 = vmax.f32 %v364, 0.0
        %v407 = vmax.f32 %v369, 0.0
        %v408 = vmax.f32 %v374, 0.0
        %v409 = vmax.f32 %v379, 0.0
        %v410 = vmax.f32 %v384, 0.0
        %v411 = vmax.f32 %v389, 0.0
        %v412 = vmax.f32 %v394, 0.0
        %v413 = vld [vmem:[#allocation5 + $0x20] sm:$0xff]
        %v414 = vld [vmem:[#allocation5 + $0x28] sm:$0xff]
        %v415 = vld [vmem:[#allocation5 + $0x30] sm:$0xff]
        %v416 = vld [vmem:[#allocation5 + $0x38] sm:$0xff]
        %v417 = vld [vmem:[#allocation5 + $0x40] sm:$0x1]
        %v418 = vlaneseq
        %v419 = vshrl.u32 %v418, 7
        %v420 = vsub.s32 0, %v419
        %v421 = vrot.slane %v417, %v420
        %vm422 = vcmask 261120
        %v424 = vsel %vm422, %v397, 0
        %v427 = vsel %vm422, %v398, 0
        %v430 = vsel %vm422, %v399, 0
        %v433 = vsel %vm422, %v400, 0
        %v436 = vsel %vm422, %v401, 0
        %v439 = vsel %vm422, %v402, 0
        %v442 = vsel %vm422, %v403, 0
        %v445 = vsel %vm422, %v404, 0
        %v448 = vsel %vm422, %v405, 0
        %v451 = vsel %vm422, %v406, 0
        %v454 = vsel %vm422, %v407, 0
        %v457 = vsel %vm422, %v408, 0
        %v460 = vsel %vm422, %v409, 0
        %v463 = vsel %vm422, %v410, 0
        %v466 = vsel %vm422, %v411, 0
        %v469 = vsel %vm422, %v412, 0
        %471 = vmatprep.subr.mxu0 0.0
        %472 = vmatpush1.msra.mxu0 %v413
        %473 = vmatprep.subr.mxu0 0.0
        %474 = vmatpush1.msra.mxu0 %v414
        %475 = vmatprep.subr.mxu0 0.0
        %476 = vmatpush1.msra.mxu0 %v415
        %477 = vmatprep.subr.mxu0 0.0
        %478 = vmatpush1.msra.mxu0 %v416
        %479 = vmatprep.subr.mxu0 0.0
        %480 = vmatpush1.msra.mxu0 0.0
        %481 = vmatprep.subr.mxu0 0.0
        %482 = vmatpush1.msra.mxu0 0.0
        %483 = vmatprep.subr.mxu0 0.0
        %484 = vmatpush1.msra.mxu0 0.0
        %485 = vmatprep.subr.mxu0 0.0
        %486 = vmatpush1.msra.mxu0 0.0
        %487 = vmatprep.subr.mxu0 0.0
        %488 = vmatpush1.msra.mxu0 0.0
        %489 = vmatprep.subr.mxu0 0.0
        %490 = vmatpush1.msra.mxu0 0.0
        %491 = vmatprep.subr.mxu0 0.0
        %492 = vmatpush1.msra.mxu0 0.0
        %493 = vmatprep.subr.mxu0 0.0
        %494 = vmatpush1.msra.mxu0 0.0
        %495 = vmatprep.subr.mxu0 0.0
        %496 = vmatpush1.msra.mxu0 0.0
        %497 = vmatprep.subr.mxu0 0.0
        %498 = vmatpush1.msra.mxu0 0.0
        %499 = vmatprep.subr.mxu0 0.0
        %500 = vmatpush1.msra.mxu0 0.0
        %501 = vmatprep.subr.mxu0 0.0
        %502 = vmatpush1.msra.mxu0 0.0
        %503 = vmatprep.subr.mxu0 0.0
        %504 = vmatpush1.msra.mxu0 0.0
        %505 = vmatprep.subr.mxu0 0.0
        %506 = vmatpush1.msra.mxu0 0.0
        %507 = vmatprep.subr.mxu0 0.0
        %508 = vmatpush1.msra.mxu0 0.0
        %509 = vmatprep.subr.mxu0 0.0
        %510 = vmatpush1.msra.mxu0 0.0
        %511 = vmatprep.subr.mxu0 0.0
        %512 = vmatpush1.msra.mxu0 0.0
        %513 = vmatprep.subr.mxu0 0.0
        %514 = vmatpush1.msra.mxu0 0.0
        %515 = vmatprep.subr.mxu0 0.0
        %516 = vmatpush1.msra.mxu0 0.0
        %517 = vmatprep.subr.mxu0 0.0
        %518 = vmatpush1.msra.mxu0 0.0
        %519 = vmatprep.subr.mxu0 0.0
        %520 = vmatpush1.msra.mxu0 0.0
        %521 = vmatprep.subr.mxu0 0.0
        %522 = vmatpush1.msra.mxu0 0.0
        %523 = vmatprep.subr.mxu0 0.0
        %524 = vmatpush1.msra.mxu0 0.0
        %525 = vmatprep.subr.mxu0 0.0
        %526 = vmatpush1.msra.mxu0 0.0
        %527 = vmatprep.subr.mxu0 0.0
        %528 = vmatpush1.msra.mxu0 0.0
        %529 = vmatprep.subr.mxu0 0.0
        %530 = vmatpush1.msra.mxu0 0.0
        %531 = vmatprep.subr.mxu0 0.0
        %532 = vmatpush1.msra.mxu0 0.0
        %533 = vmatprep.subr.mxu0 0.0
        %534 = vmatpush1.msra.mxu0 0.0
        %535 = vmatprep.mubr.f32.mxu0 0.0
        %536 = vmatmul.mubr.f32.gmra.mrb[0].mxu0 %v424
        %v537 = vpop.f32.mrb[0].mxu0
        %v538 = vadd.f32 %v421, %v537
        %v539 = vpop.f32.mrb[0].mxu0
        %540 = vmatprep.mubr.f32.mxu0 0.0
        %541 = vmatmul.mubr.f32.gmra.mrb[0].mxu0 %v427
        %v542 = vpop.f32.mrb[0].mxu0
        %v543 = vadd.f32 %v421, %v542
        %v544 = vpop.f32.mrb[0].mxu0
        %545 = vmatprep.mubr.f32.mxu0 0.0
        %546 = vmatmul.mubr.f32.gmra.mrb[0].mxu0 %v430
        %v547 = vpop.f32.mrb[0].mxu0
        %v548 = vadd.f32 %v421, %v547
        %v549 = vpop.f32.mrb[0].mxu0
        %550 = vmatprep.mubr.f32.mxu0 0.0
        %551 = vmatmul.mubr.f32.gmra.mrb[0].mxu0 %v433
        %v552 = vpop.f32.mrb[0].mxu0
        %v553 = vadd.f32 %v421, %v552
        %v554 = vpop.f32.mrb[0].mxu0
        %555 = vmatprep.mubr.f32.mxu0 0.0
        %556 = vmatmul.mubr.f32.gmra.mrb[0].mxu0 %v436
        %v557 = vpop.f32.mrb[0].mxu0
        %v558 = vadd.f32 %v421, %v557
        %v559 = vpop.f32.mrb[0].mxu0
        %560 = vmatprep.mubr.f32.mxu0 0.0
        %561 = vmatmul.mubr.f32.gmra.mrb[0].mxu0 %v439
        %v562 = vpop.f32.mrb[0].mxu0
        %v563 = vadd.f32 %v421, %v562
        %v564 = vpop.f32.mrb[0].mxu0
        %565 = vmatprep.mubr.f32.mxu0 0.0
        %566 = vmatmul.mubr.f32.gmra.mrb[0].mxu0 %v442
        %v567 = vpop.f32.mrb[0].mxu0
        %v568 = vadd.f32 %v421, %v567
        %v569 = vpop.f32.mrb[0].mxu0
        %570 = vmatprep.mubr.f32.mxu0 0.0
        %571 = vmatmul.mubr.f32.gmra.mrb[0].mxu0 %v445
        %v572 = vpop.f32.mrb[0].mxu0
        %v573 = vadd.f32 %v421, %v572
        %v574 = vpop.f32.mrb[0].mxu0
        %575 = vmatprep.mubr.f32.mxu0 0.0
        %576 = vmatmul.mubr.f32.gmra.mrb[0].mxu0 %v448
        %v577 = vpop.f32.mrb[0].mxu0
        %v578 = vadd.f32 %v421, %v577
        %v579 = vpop.f32.mrb[0].mxu0
        %580 = vmatprep.mubr.f32.mxu0 0.0
        %581 = vmatmul.mubr.f32.gmra.mrb[0].mxu0 %v451
        %v582 = vpop.f32.mrb[0].mxu0
        %v583 = vadd.f32 %v421, %v582
        %v584 = vpop.f32.mrb[0].mxu0
        %585 = vmatprep.mubr.f32.mxu0 0.0
        %586 = vmatmul.mubr.f32.gmra.mrb[0].mxu0 %v454
        %v587 = vpop.f32.mrb[0].mxu0
        %v588 = vadd.f32 %v421, %v587
        %v589 = vpop.f32.mrb[0].mxu0
        %590 = vmatprep.mubr.f32.mxu0 0.0
        %591 = vmatmul.mubr.f32.gmra.mrb[0].mxu0 %v457
        %v592 = vpop.f32.mrb[0].mxu0
        %v593 = vadd.f32 %v421, %v592
        %v594 = vpop.f32.mrb[0].mxu0
        %595 = vmatprep.mubr.f32.mxu0 0.0
        %596 = vmatmul.mubr.f32.gmra.mrb[0].mxu0 %v460
        %v597 = vpop.f32.mrb[0].mxu0
        %v598 = vadd.f32 %v421, %v597
        %v599 = vpop.f32.mrb[0].mxu0
        %600 = vmatprep.mubr.f32.mxu0 0.0
        %601 = vmatmul.mubr.f32.gmra.mrb[0].mxu0 %v463
        %v602 = vpop.f32.mrb[0].mxu0
        %v603 = vadd.f32 %v421, %v602
        %v604 = vpop.f32.mrb[0].mxu0
        %605 = vmatprep.mubr.f32.mxu0 0.0
        %606 = vmatmul.mubr.f32.gmra.mrb[0].mxu0 %v466
        %v607 = vpop.f32.mrb[0].mxu0
        %v608 = vadd.f32 %v421, %v607
        %v609 = vpop.f32.mrb[0].mxu0
        %610 = vmatprep.mubr.f32.mxu0 0.0
        %611 = vmatmul.mubr.f32.gmra.mrb[0].mxu0 %v469
        %v612 = vpop.f32.mrb[0].mxu0
        %v613 = vadd.f32 %v421, %v612
        %v614 = vpop.f32.mrb[0].mxu0
        %615 = vdwg.mxu0
        %v616 = vmax.f32 %v538, 0.0
        %v617 = vmax.f32 %v543, 0.0
        %v618 = vmax.f32 %v548, 0.0
        %v619 = vmax.f32 %v553, 0.0
        %v620 = vmax.f32 %v558, 0.0
        %v621 = vmax.f32 %v563, 0.0
        %v622 = vmax.f32 %v568, 0.0
        %v623 = vmax.f32 %v573, 0.0
        %v624 = vmax.f32 %v578, 0.0
        %v625 = vmax.f32 %v583, 0.0
        %v626 = vmax.f32 %v588, 0.0
        %v627 = vmax.f32 %v593, 0.0
        %v628 = vmax.f32 %v598, 0.0
        %v629 = vmax.f32 %v603, 0.0
        %v630 = vmax.f32 %v608, 0.0
        %v631 = vmax.f32 %v613, 0.0
        %v632 = vld [vmem:[#allocation5 + $0x48] sm:$0xff]
        %v633 = vld [vmem:[#allocation5 + $0x50] sm:$0xff]
        %v634 = vld [vmem:[#allocation5 + $0x58] sm:$0xff]
        %v635 = vld [vmem:[#allocation5 + $0x60] sm:$0xff]
        %v636 = vld [vmem:[#allocation5 + $0x68] sm:$0x1]
        %v637 = vlaneseq
        %v638 = vshrl.u32 %v637, 7
        %v639 = vsub.s32 0, %v638
        %v640 = vrot.slane %v636, %v639
        %v642 = vsel %vm422, %v616, 0
        %v645 = vsel %vm422, %v617, 0
        %v648 = vsel %vm422, %v618, 0
        %v651 = vsel %vm422, %v619, 0
        %v654 = vsel %vm422, %v620, 0
        %v657 = vsel %vm422, %v621, 0
        %v660 = vsel %vm422, %v622, 0
        %v663 = vsel %vm422, %v623, 0
        %v666 = vsel %vm422, %v624, 0
        %v669 = vsel %vm422, %v625, 0
        %v672 = vsel %vm422, %v626, 0
        %v675 = vsel %vm422, %v627, 0
        %v678 = vsel %vm422, %v628, 0
        %v681 = vsel %vm422, %v629, 0
        %v684 = vsel %vm422, %v630, 0
        %v687 = vsel %vm422, %v631, 0
        %689 = vmatprep.subr.mxu0 0.0
        %690 = vmatpush1.msra.mxu0 %v632
        %691 = vmatprep.subr.mxu0 0.0
        %692 = vmatpush1.msra.mxu0 %v633
        %693 = vmatprep.subr.mxu0 0.0
        %694 = vmatpush1.msra.mxu0 %v634
        %695 = vmatprep.subr.mxu0 0.0
        %696 = vmatpush1.msra.mxu0 %v635
        %697 = vmatprep.subr.mxu0 0.0
        %698 = vmatpush1.msra.mxu0 0.0
        %699 = vmatprep.subr.mxu0 0.0
        %700 = vmatpush1.msra.mxu0 0.0
        %701 = vmatprep.subr.mxu0 0.0
        %702 = vmatpush1.msra.mxu0 0.0
        %703 = vmatprep.subr.mxu0 0.0
        %704 = vmatpush1.msra.mxu0 0.0
        %705 = vmatprep.subr.mxu0 0.0
        %706 = vmatpush1.msra.mxu0 0.0
        %707 = vmatprep.subr.mxu0 0.0
        %708 = vmatpush1.msra.mxu0 0.0
        %709 = vmatprep.subr.mxu0 0.0
        %710 = vmatpush1.msra.mxu0 0.0
        %711 = vmatprep.subr.mxu0 0.0
        %712 = vmatpush1.msra.mxu0 0.0
        %713 = vmatprep.subr.mxu0 0.0
        %714 = vmatpush1.msra.mxu0 0.0
        %715 = vmatprep.subr.mxu0 0.0
        %716 = vmatpush1.msra.mxu0 0.0
        %717 = vmatprep.subr.mxu0 0.0
        %718 = vmatpush1.msra.mxu0 0.0
        %719 = vmatprep.subr.mxu0 0.0
        %720 = vmatpush1.msra.mxu0 0.0
        %721 = vmatprep.subr.mxu0 0.0
        %722 = vmatpush1.msra.mxu0 0.0
        %723 = vmatprep.subr.mxu0 0.0
        %724 = vmatpush1.msra.mxu0 0.0
        %725 = vmatprep.subr.mxu0 0.0
        %726 = vmatpush1.msra.mxu0 0.0
        %727 = vmatprep.subr.mxu0 0.0
        %728 = vmatpush1.msra.mxu0 0.0
        %729 = vmatprep.subr.mxu0 0.0
        %730 = vmatpush1.msra.mxu0 0.0
        %731 = vmatprep.subr.mxu0 0.0
        %732 = vmatpush1.msra.mxu0 0.0
        %733 = vmatprep.subr.mxu0 0.0
        %734 = vmatpush1.msra.mxu0 0.0
        %735 = vmatprep.subr.mxu0 0.0
        %736 = vmatpush1.msra.mxu0 0.0
        %737 = vmatprep.subr.mxu0 0.0
        %738 = vmatpush1.msra.mxu0 0.0
        %739 = vmatprep.subr.mxu0 0.0
        %740 = vmatpush1.msra.mxu0 0.0
        %741 = vmatprep.subr.mxu0 0.0
        %742 = vmatpush1.msra.mxu0 0.0
        %743 = vmatprep.subr.mxu0 0.0
        %744 = vmatpush1.msra.mxu0 0.0
        %745 = vmatprep.subr.mxu0 0.0
        %746 = vmatpush1.msra.mxu0 0.0
        %747 = vmatprep.subr.mxu0 0.0
        %748 = vmatpush1.msra.mxu0 0.0
        %749 = vmatprep.subr.mxu0 0.0
        %750 = vmatpush1.msra.mxu0 0.0
        %751 = vmatprep.subr.mxu0 0.0
        %752 = vmatpush1.msra.mxu0 0.0
        %753 = vmatprep.mubr.f32.mxu0 0.0
        %754 = vmatmul.mubr.f32.gmra.mrb[0].mxu0 %v642
        %v755 = vpop.f32.mrb[0].mxu0
        %v756 = vadd.f32 %v640, %v755
        %v757 = vpop.f32.mrb[0].mxu0
        %758 = vmatprep.mubr.f32.mxu0 0.0
        %759 = vmatmul.mubr.f32.gmra.mrb[0].mxu0 %v645
        %v760 = vpop.f32.mrb[0].mxu0
        %v761 = vadd.f32 %v640, %v760
        %v762 = vpop.f32.mrb[0].mxu0
        %763 = vmatprep.mubr.f32.mxu0 0.0
        %764 = vmatmul.mubr.f32.gmra.mrb[0].mxu0 %v648
        %v765 = vpop.f32.mrb[0].mxu0
        %v766 = vadd.f32 %v640, %v765
        %v767 = vpop.f32.mrb[0].mxu0
        %768 = vmatprep.mubr.f32.mxu0 0.0
        %769 = vmatmul.mubr.f32.gmra.mrb[0].mxu0 %v651
        %v770 = vpop.f32.mrb[0].mxu0
        %v771 = vadd.f32 %v640, %v770
        %v772 = vpop.f32.mrb[0].mxu0
        %773 = vmatprep.mubr.f32.mxu0 0.0
        %774 = vmatmul.mubr.f32.gmra.mrb[0].mxu0 %v654
        %v775 = vpop.f32.mrb[0].mxu0
        %v776 = vadd.f32 %v640, %v775
        %v777 = vpop.f32.mrb[0].mxu0
        %778 = vmatprep.mubr.f32.mxu0 0.0
        %779 = vmatmul.mubr.f32.gmra.mrb[0].mxu0 %v657
        %v780 = vpop.f32.mrb[0].mxu0
        %v781 = vadd.f32 %v640, %v780
        %v782 = vpop.f32.mrb[0].mxu0
        %783 = vmatprep.mubr.f32.mxu0 0.0
        %784 = vmatmul.mubr.f32.gmra.mrb[0].mxu0 %v660
        %v785 = vpop.f32.mrb[0].mxu0
        %v786 = vadd.f32 %v640, %v785
        %v787 = vpop.f32.mrb[0].mxu0
        %788 = vmatprep.mubr.f32.mxu0 0.0
        %789 = vmatmul.mubr.f32.gmra.mrb[0].mxu0 %v663
        %v790 = vpop.f32.mrb[0].mxu0
        %v791 = vadd.f32 %v640, %v790
        %v792 = vpop.f32.mrb[0].mxu0
        %793 = vmatprep.mubr.f32.mxu0 0.0
        %794 = vmatmul.mubr.f32.gmra.mrb[0].mxu0 %v666
        %v795 = vpop.f32.mrb[0].mxu0
        %v796 = vadd.f32 %v640, %v795
        %v797 = vpop.f32.mrb[0].mxu0
        %798 = vmatprep.mubr.f32.mxu0 0.0
        %799 = vmatmul.mubr.f32.gmra.mrb[0].mxu0 %v669
        %v800 = vpop.f32.mrb[0].mxu0
        %v801 = vadd.f32 %v640, %v800
        %v802 = vpop.f32.mrb[0].mxu0
        %803 = vmatprep.mubr.f32.mxu0 0.0
        %804 = vmatmul.mubr.f32.gmra.mrb[0].mxu0 %v672
        %v805 = vpop.f32.mrb[0].mxu0
        %v806 = vadd.f32 %v640, %v805
        %v807 = vpop.f32.mrb[0].mxu0
        %808 = vmatprep.mubr.f32.mxu0 0.0
        %809 = vmatmul.mubr.f32.gmra.mrb[0].mxu0 %v675
        %v810 = vpop.f32.mrb[0].mxu0
        %v811 = vadd.f32 %v640, %v810
        %v812 = vpop.f32.mrb[0].mxu0
        %813 = vmatprep.mubr.f32.mxu0 0.0
        %814 = vmatmul.mubr.f32.gmra.mrb[0].mxu0 %v678
        %v815 = vpop.f32.mrb[0].mxu0
        %v816 = vadd.f32 %v640, %v815
        %v817 = vpop.f32.mrb[0].mxu0
        %818 = vmatprep.mubr.f32.mxu0 0.0
        %819 = vmatmul.mubr.f32.gmra.mrb[0].mxu0 %v681
        %v820 = vpop.f32.mrb[0].mxu0
        %v821 = vadd.f32 %v640, %v820
        %v822 = vpop.f32.mrb[0].mxu0
        %823 = vmatprep.mubr.f32.mxu0 0.0
        %824 = vmatmul.mubr.f32.gmra.mrb[0].mxu0 %v684
        %v825 = vpop.f32.mrb[0].mxu0
        %v826 = vadd.f32 %v640, %v825
        %v827 = vpop.f32.mrb[0].mxu0
        %828 = vmatprep.mubr.f32.mxu0 0.0
        %829 = vmatmul.mubr.f32.gmra.mrb[0].mxu0 %v687
        %v830 = vpop.f32.mrb[0].mxu0
        %v831 = vadd.f32 %v640, %v830
        %v832 = vpop.f32.mrb[0].mxu0
        %833 = vdwg.mxu0
        %v834 = vmax.f32 %v756, 0.0
        %v835 = vmax.f32 %v761, 0.0
        %v836 = vmax.f32 %v766, 0.0
        %v837 = vmax.f32 %v771, 0.0
        %v838 = vmax.f32 %v776, 0.0
        %v839 = vmax.f32 %v781, 0.0
        %v840 = vmax.f32 %v786, 0.0
        %v841 = vmax.f32 %v791, 0.0
        %v842 = vmax.f32 %v796, 0.0
        %v843 = vmax.f32 %v801, 0.0
        %v844 = vmax.f32 %v806, 0.0
        %v845 = vmax.f32 %v811, 0.0
        %v846 = vmax.f32 %v816, 0.0
        %v847 = vmax.f32 %v821, 0.0
        %v848 = vmax.f32 %v826, 0.0
        %v849 = vmax.f32 %v831, 0.0
        %v850 = vmul.f32 %v834, 0.5
        %v851 = vmul.f32 %v835, 0.5
        %v852 = vmul.f32 %v836, 0.5
        %v853 = vmul.f32 %v837, 0.5
        %v854 = vmul.f32 %v838, 0.5
        %v855 = vmul.f32 %v839, 0.5
        %v856 = vmul.f32 %v840, 0.5
        %v857 = vmul.f32 %v841, 0.5
        %v858 = vmul.f32 %v842, 0.5
        %v859 = vmul.f32 %v843, 0.5
        %v860 = vmul.f32 %v844, 0.5
        %v861 = vmul.f32 %v845, 0.5
        %v862 = vmul.f32 %v846, 0.5
        %v863 = vmul.f32 %v847, 0.5
        %v864 = vmul.f32 %v848, 0.5
        %v865 = vmul.f32 %v849, 0.5
        %v866 = vmul.f32 %v850, 1.442695
        %v867 = vpow.pop %v866
        %v868 = vmul.f32 %v851, 1.442695
        %v869 = vpow.pop %v868
        %v870 = vmul.f32 %v852, 1.442695
        %v871 = vpow.pop %v870
        %v872 = vmul.f32 %v853, 1.442695
        %v873 = vpow.pop %v872
        %v874 = vmul.f32 %v854, 1.442695
        %v875 = vpow.pop %v874
        %v876 = vmul.f32 %v855, 1.442695
        %v877 = vpow.pop %v876
        %v878 = vmul.f32 %v856, 1.442695
        %v879 = vpow.pop %v878
        %v880 = vmul.f32 %v857, 1.442695
        %v881 = vpow.pop %v880
        %v882 = vmul.f32 %v858, 1.442695
        %v883 = vpow.pop %v882
        %v884 = vmul.f32 %v859, 1.442695
        %v885 = vpow.pop %v884
        %v886 = vmul.f32 %v860, 1.442695
        %v887 = vpow.pop %v886
        %v888 = vmul.f32 %v861, 1.442695
        %v889 = vpow.pop %v888
        %v890 = vmul.f32 %v862, 1.442695
        %v891 = vpow.pop %v890
        %v892 = vmul.f32 %v863, 1.442695
        %v893 = vpow.pop %v892
        %v894 = vmul.f32 %v864, 1.442695
        %v895 = vpow.pop %v894
        %v896 = vmul.f32 %v865, 1.442695
        %v897 = vpow.pop %v896
        %914 = vrot.lane.b32.xlu0 %v867, 120
        %v915 = vpop.permute.xlu0 %914
        %916 = vrot.lane.b32.xlu0 %v869, 120
        %v917 = vpop.permute.xlu0 %916
        %918 = vrot.lane.b32.xlu0 %v871, 120
        %v919 = vpop.permute.xlu0 %918
        %920 = vrot.lane.b32.xlu0 %v873, 120
        %v921 = vpop.permute.xlu0 %920
        %922 = vrot.lane.b32.xlu0 %v875, 120
        %v923 = vpop.permute.xlu0 %922
        %924 = vrot.lane.b32.xlu0 %v877, 120
        %v925 = vpop.permute.xlu0 %924
        %926 = vrot.lane.b32.xlu0 %v879, 120
        %v927 = vpop.permute.xlu0 %926
        %928 = vrot.lane.b32.xlu0 %v881, 120
        %v929 = vpop.permute.xlu0 %928
        %930 = vrot.lane.b32.xlu0 %v883, 120
        %v931 = vpop.permute.xlu0 %930
        %932 = vrot.lane.b32.xlu0 %v885, 120
        %v933 = vpop.permute.xlu0 %932
        %934 = vrot.lane.b32.xlu0 %v887, 120
        %v935 = vpop.permute.xlu0 %934
        %936 = vrot.lane.b32.xlu0 %v889, 120
        %v937 = vpop.permute.xlu0 %936
        %938 = vrot.lane.b32.xlu0 %v891, 120
        %v939 = vpop.permute.xlu0 %938
        %940 = vrot.lane.b32.xlu0 %v893, 120
        %v941 = vpop.permute.xlu0 %940
        %942 = vrot.lane.b32.xlu0 %v895, 120
        %v943 = vpop.permute.xlu0 %942
        %944 = vrot.lane.b32.xlu0 %v897, 120
        %v945 = vpop.permute.xlu0 %944
        %v962 = vmul.f32 %v179, %v915
        %v963 = vmul.f32 %v180, %v917
        %v964 = vmul.f32 %v181, %v919
        %v965 = vmul.f32 %v182, %v921
        %v966 = vmul.f32 %v183, %v923
        %v967 = vmul.f32 %v184, %v925
        %v968 = vmul.f32 %v185, %v927
        %v969 = vmul.f32 %v186, %v929
        %v970 = vmul.f32 %v187, %v931
        %v971 = vmul.f32 %v188, %v933
        %v972 = vmul.f32 %v189, %v935
        %v973 = vmul.f32 %v190, %v937
        %v974 = vmul.f32 %v191, %v939
        %v975 = vmul.f32 %v192, %v941
        %v976 = vmul.f32 %v193, %v943
        %v977 = vmul.f32 %v194, %v945
        %994 = vrot.lane.b32.xlu0 %v756, 24
        %v995 = vpop.permute.xlu0 %994
        %996 = vrot.lane.b32.xlu0 %v761, 24
        %v997 = vpop.permute.xlu0 %996
        %998 = vrot.lane.b32.xlu0 %v766, 24
        %v999 = vpop.permute.xlu0 %998
        %1000 = vrot.lane.b32.xlu0 %v771, 24
        %v1001 = vpop.permute.xlu0 %1000
        %1002 = vrot.lane.b32.xlu0 %v776, 24
        %v1003 = vpop.permute.xlu0 %1002
        %1004 = vrot.lane.b32.xlu0 %v781, 24
        %v1005 = vpop.permute.xlu0 %1004
        %1006 = vrot.lane.b32.xlu0 %v786, 24
        %v1007 = vpop.permute.xlu0 %1006
        %1008 = vrot.lane.b32.xlu0 %v791, 24
        %v1009 = vpop.permute.xlu0 %1008
        %1010 = vrot.lane.b32.xlu0 %v796, 24
        %v1011 = vpop.permute.xlu0 %1010
        %1012 = vrot.lane.b32.xlu0 %v801, 24
        %v1013 = vpop.permute.xlu0 %1012
        %1014 = vrot.lane.b32.xlu0 %v806, 24
        %v1015 = vpop.permute.xlu0 %1014
        %1016 = vrot.lane.b32.xlu0 %v811, 24
        %v1017 = vpop.permute.xlu0 %1016
        %1018 = vrot.lane.b32.xlu0 %v816, 24
        %v1019 = vpop.permute.xlu0 %1018
        %1020 = vrot.lane.b32.xlu0 %v821, 24
        %v1021 = vpop.permute.xlu0 %1020
        %1022 = vrot.lane.b32.xlu0 %v826, 24
        %v1023 = vpop.permute.xlu0 %1022
        %1024 = vrot.lane.b32.xlu0 %v831, 24
        %v1025 = vpop.permute.xlu0 %1024
        %v1042 = vadd.f32 %v962, %v995
        %v1043 = vadd.f32 %v963, %v997
        %v1044 = vadd.f32 %v964, %v999
        %v1045 = vadd.f32 %v965, %v1001
        %v1046 = vadd.f32 %v966, %v1003
        %v1047 = vadd.f32 %v967, %v1005
        %v1048 = vadd.f32 %v968, %v1007
        %v1049 = vadd.f32 %v969, %v1009
        %v1050 = vadd.f32 %v970, %v1011
        %v1051 = vadd.f32 %v971, %v1013
        %v1052 = vadd.f32 %v972, %v1015
        %v1053 = vadd.f32 %v973, %v1017
        %v1054 = vadd.f32 %v974, %v1019
        %v1055 = vadd.f32 %v975, %v1021
        %v1056 = vadd.f32 %v976, %v1023
        %v1057 = vadd.f32 %v977, %v1025
        %v1058 = vld [vmem:[#allocation5 + $0x70] sm:$0xff]
        %v1059 = vld [vmem:[#allocation5 + $0x78] sm:$0xff]
        %v1060 = vld [vmem:[#allocation5 + $0x80] sm:$0xff]
        %v1061 = vld [vmem:[#allocation5 + $0x88] sm:$0xff]
        %v1062 = vld [vmem:[#allocation5 + $0x90] sm:$0xff]
        %1063 = vrot.lane.b32.xlu0 %v179, 112
        %v1064 = vpop.permute.xlu0 %1063
        %1065 = vrot.lane.b32.xlu0 %v180, 112
        %v1066 = vpop.permute.xlu0 %1065
        %1067 = vrot.lane.b32.xlu0 %v181, 112
        %v1068 = vpop.permute.xlu0 %1067
        %1069 = vrot.lane.b32.xlu0 %v182, 112
        %v1070 = vpop.permute.xlu0 %1069
        %1071 = vrot.lane.b32.xlu0 %v183, 112
        %v1072 = vpop.permute.xlu0 %1071
        %1073 = vrot.lane.b32.xlu0 %v184, 112
        %v1074 = vpop.permute.xlu0 %1073
        %1075 = vrot.lane.b32.xlu0 %v185, 112
        %v1076 = vpop.permute.xlu0 %1075
        %1077 = vrot.lane.b32.xlu0 %v186, 112
        %v1078 = vpop.permute.xlu0 %1077
        %1079 = vrot.lane.b32.xlu0 %v187, 112
        %v1080 = vpop.permute.xlu0 %1079
        %1081 = vrot.lane.b32.xlu0 %v188, 112
        %v1082 = vpop.permute.xlu0 %1081
        %1083 = vrot.lane.b32.xlu0 %v189, 112
        %v1084 = vpop.permute.xlu0 %1083
        %1085 = vrot.lane.b32.xlu0 %v190, 112
        %v1086 = vpop.permute.xlu0 %1085
        %1087 = vrot.lane.b32.xlu0 %v191, 112
        %v1088 = vpop.permute.xlu0 %1087
        %1089 = vrot.lane.b32.xlu0 %v192, 112
        %v1090 = vpop.permute.xlu0 %1089
        %1091 = vrot.lane.b32.xlu0 %v193, 112
        %v1092 = vpop.permute.xlu0 %1091
        %1093 = vrot.lane.b32.xlu0 %v194, 112
        %v1094 = vpop.permute.xlu0 %1093
        %vm1095 = vcmask 64512
        %v1096 = vsel %vm1095, %v1064, 0
        %v1098 = vsel %vm1095, %v1066, 0
        %v1100 = vsel %vm1095, %v1068, 0
        %v1102 = vsel %vm1095, %v1070, 0
        %v1104 = vsel %vm1095, %v1072, 0
        %v1106 = vsel %vm1095, %v1074, 0
        %v1108 = vsel %vm1095, %v1076, 0
        %v1110 = vsel %vm1095, %v1078, 0
        %v1112 = vsel %vm1095, %v1080, 0
        %v1114 = vsel %vm1095, %v1082, 0
        %v1116 = vsel %vm1095, %v1084, 0
        %v1118 = vsel %vm1095, %v1086, 0
        %v1120 = vsel %vm1095, %v1088, 0
        %v1122 = vsel %vm1095, %v1090, 0
        %v1124 = vsel %vm1095, %v1092, 0
        %v1126 = vsel %vm1095, %v1094, 0
        %1128 = vmatprep.subr.mxu0 0.0
        %1129 = vmatpush1.msra.mxu0 %v1062
        %1130 = vmatprep.subr.mxu0 0.0
        %1131 = vmatpush1.msra.mxu0 0.0
        %1132 = vmatprep.subr.mxu0 0.0
        %1133 = vmatpush1.msra.mxu0 0.0
        %1134 = vmatprep.subr.mxu0 0.0
        %1135 = vmatpush1.msra.mxu0 0.0
        %1136 = vmatprep.subr.mxu0 0.0
        %1137 = vmatpush1.msra.mxu0 0.0
        %1138 = vmatprep.subr.mxu0 0.0
        %1139 = vmatpush1.msra.mxu0 0.0
        %1140 = vmatprep.subr.mxu0 0.0
        %1141 = vmatpush1.msra.mxu0 0.0
        %1142 = vmatprep.subr.mxu0 0.0
        %1143 = vmatpush1.msra.mxu0 0.0
        %1144 = vmatprep.subr.mxu0 0.0
        %1145 = vmatpush1.msra.mxu0 0.0
        %1146 = vmatprep.subr.mxu0 0.0
        %1147 = vmatpush1.msra.mxu0 0.0
        %1148 = vmatprep.subr.mxu0 0.0
        %1149 = vmatpush1.msra.mxu0 0.0
        %1150 = vmatprep.subr.mxu0 0.0
        %1151 = vmatpush1.msra.mxu0 0.0
        %1152 = vmatprep.subr.mxu0 0.0
        %1153 = vmatpush1.msra.mxu0 0.0
        %1154 = vmatprep.subr.mxu0 0.0
        %1155 = vmatpush1.msra.mxu0 0.0
        %1156 = vmatprep.subr.mxu0 0.0
        %1157 = vmatpush1.msra.mxu0 0.0
        %1158 = vmatprep.subr.mxu0 0.0
        %1159 = vmatpush1.msra.mxu0 0.0
        %1160 = vmatprep.subr.mxu0 0.0
        %1161 = vmatpush1.msra.mxu0 0.0
        %1162 = vmatprep.subr.mxu0 0.0
        %1163 = vmatpush1.msra.mxu0 0.0
        %1164 = vmatprep.subr.mxu0 0.0
        %1165 = vmatpush1.msra.mxu0 0.0
        %1166 = vmatprep.subr.mxu0 0.0
        %1167 = vmatpush1.msra.mxu0 0.0
        %1168 = vmatprep.subr.mxu0 0.0
        %1169 = vmatpush1.msra.mxu0 0.0
        %1170 = vmatprep.subr.mxu0 0.0
        %1171 = vmatpush1.msra.mxu0 0.0
        %1172 = vmatprep.subr.mxu0 0.0
        %1173 = vmatpush1.msra.mxu0 0.0
        %1174 = vmatprep.subr.mxu0 0.0
        %1175 = vmatpush1.msra.mxu0 0.0
        %1176 = vmatprep.subr.mxu0 0.0
        %1177 = vmatpush1.msra.mxu0 0.0
        %1178 = vmatprep.subr.mxu0 0.0
        %1179 = vmatpush1.msra.mxu0 0.0
        %1180 = vmatprep.subr.mxu0 0.0
        %1181 = vmatpush1.msra.mxu0 0.0
        %1182 = vmatprep.subr.mxu0 0.0
        %1183 = vmatpush1.msra.mxu0 0.0
        %1184 = vmatprep.subr.mxu0 0.0
        %1185 = vmatpush1.msra.mxu0 0.0
        %1186 = vmatprep.subr.mxu0 0.0
        %1187 = vmatpush1.msra.mxu0 0.0
        %1188 = vmatprep.subr.mxu0 0.0
        %1189 = vmatpush1.msra.mxu0 0.0
        %1190 = vmatprep.subr.mxu0 0.0
        %1191 = vmatpush1.msra.mxu0 0.0
        %1192 = vmatprep.mubr.f32.mxu0 0.0
        %1193 = vmatmul.mubr.f32.gmra.mrb[0].mxu0 %v1096
        %v1194 = vpop.f32.mrb[0].mxu0
        %v1195 = vadd.f32 0.0, %v1194
        %v1196 = vpop.f32.mrb[0].mxu0
        %1197 = vmatprep.mubr.f32.mxu0 0.0
        %1198 = vmatmul.mubr.f32.gmra.mrb[0].mxu0 %v1098
        %v1199 = vpop.f32.mrb[0].mxu0
        %v1200 = vadd.f32 0.0, %v1199
        %v1201 = vpop.f32.mrb[0].mxu0
        %1202 = vmatprep.mubr.f32.mxu0 0.0
        %1203 = vmatmul.mubr.f32.gmra.mrb[0].mxu0 %v1100
        %v1204 = vpop.f32.mrb[0].mxu0
        %v1205 = vadd.f32 0.0, %v1204
        %v1206 = vpop.f32.mrb[0].mxu0
        %1207 = vmatprep.mubr.f32.mxu0 0.0
        %1208 = vmatmul.mubr.f32.gmra.mrb[0].mxu0 %v1102
        %v1209 = vpop.f32.mrb[0].mxu0
        %v1210 = vadd.f32 0.0, %v1209
        %v1211 = vpop.f32.mrb[0].mxu0
        %1212 = vmatprep.mubr.f32.mxu0 0.0
        %1213 = vmatmul.mubr.f32.gmra.mrb[0].mxu0 %v1104
        %v1214 = vpop.f32.mrb[0].mxu0
        %v1215 = vadd.f32 0.0, %v1214
        %v1216 = vpop.f32.mrb[0].mxu0
        %1217 = vmatprep.mubr.f32.mxu0 0.0
        %1218 = vmatmul.mubr.f32.gmra.mrb[0].mxu0 %v1106
        %v1219 = vpop.f32.mrb[0].mxu0
        %v1220 = vadd.f32 0.0, %v1219
        %v1221 = vpop.f32.mrb[0].mxu0
        %1222 = vmatprep.mubr.f32.mxu0 0.0
        %1223 = vmatmul.mubr.f32.gmra.mrb[0].mxu0 %v1108
        %v1224 = vpop.f32.mrb[0].mxu0
        %v1225 = vadd.f32 0.0, %v1224
        %v1226 = vpop.f32.mrb[0].mxu0
        %1227 = vmatprep.mubr.f32.mxu0 0.0
        %1228 = vmatmul.mubr.f32.gmra.mrb[0].mxu0 %v1110
        %v1229 = vpop.f32.mrb[0].mxu0
        %v1230 = vadd.f32 0.0, %v1229
        %v1231 = vpop.f32.mrb[0].mxu0
        %1232 = vmatprep.mubr.f32.mxu0 0.0
        %1233 = vmatmul.mubr.f32.gmra.mrb[0].mxu0 %v1112
        %v1234 = vpop.f32.mrb[0].mxu0
        %v1235 = vadd.f32 0.0, %v1234
        %v1236 = vpop.f32.mrb[0].mxu0
        %1237 = vmatprep.mubr.f32.mxu0 0.0
        %1238 = vmatmul.mubr.f32.gmra.mrb[0].mxu0 %v1114
        %v1239 = vpop.f32.mrb[0].mxu0
        %v1240 = vadd.f32 0.0, %v1239
        %v1241 = vpop.f32.mrb[0].mxu0
        %1242 = vmatprep.mubr.f32.mxu0 0.0
        %1243 = vmatmul.mubr.f32.gmra.mrb[0].mxu0 %v1116
        %v1244 = vpop.f32.mrb[0].mxu0
        %v1245 = vadd.f32 0.0, %v1244
        %v1246 = vpop.f32.mrb[0].mxu0
        %1247 = vmatprep.mubr.f32.mxu0 0.0
        %1248 = vmatmul.mubr.f32.gmra.mrb[0].mxu0 %v1118
        %v1249 = vpop.f32.mrb[0].mxu0
        %v1250 = vadd.f32 0.0, %v1249
        %v1251 = vpop.f32.mrb[0].mxu0
        %1252 = vmatprep.mubr.f32.mxu0 0.0
        %1253 = vmatmul.mubr.f32.gmra.mrb[0].mxu0 %v1120
        %v1254 = vpop.f32.mrb[0].mxu0
        %v1255 = vadd.f32 0.0, %v1254
        %v1256 = vpop.f32.mrb[0].mxu0
        %1257 = vmatprep.mubr.f32.mxu0 0.0
        %1258 = vmatmul.mubr.f32.gmra.mrb[0].mxu0 %v1122
        %v1259 = vpop.f32.mrb[0].mxu0
        %v1260 = vadd.f32 0.0, %v1259
        %v1261 = vpop.f32.mrb[0].mxu0
        %1262 = vmatprep.mubr.f32.mxu0 0.0
        %1263 = vmatmul.mubr.f32.gmra.mrb[0].mxu0 %v1124
        %v1264 = vpop.f32.mrb[0].mxu0
        %v1265 = vadd.f32 0.0, %v1264
        %v1266 = vpop.f32.mrb[0].mxu0
        %1267 = vmatprep.mubr.f32.mxu0 0.0
        %1268 = vmatmul.mubr.f32.gmra.mrb[0].mxu0 %v1126
        %v1269 = vpop.f32.mrb[0].mxu0
        %v1270 = vadd.f32 0.0, %v1269
        %v1271 = vpop.f32.mrb[0].mxu0
        %1272 = vdwg.mxu0
        %1289 = vrot.lane.b32.xlu0 %v1042, 104
        %v1290 = vpop.permute.xlu0 %1289
        %1291 = vrot.lane.b32.xlu0 %v1043, 104
        %v1292 = vpop.permute.xlu0 %1291
        %1293 = vrot.lane.b32.xlu0 %v1044, 104
        %v1294 = vpop.permute.xlu0 %1293
        %1295 = vrot.lane.b32.xlu0 %v1045, 104
        %v1296 = vpop.permute.xlu0 %1295
        %1297 = vrot.lane.b32.xlu0 %v1046, 104
        %v1298 = vpop.permute.xlu0 %1297
        %1299 = vrot.lane.b32.xlu0 %v1047, 104
        %v1300 = vpop.permute.xlu0 %1299
        %1301 = vrot.lane.b32.xlu0 %v1048, 104
        %v1302 = vpop.permute.xlu0 %1301
        %1303 = vrot.lane.b32.xlu0 %v1049, 104
        %v1304 = vpop.permute.xlu0 %1303
        %1305 = vrot.lane.b32.xlu0 %v1050, 104
        %v1306 = vpop.permute.xlu0 %1305
        %1307 = vrot.lane.b32.xlu0 %v1051, 104
        %v1308 = vpop.permute.xlu0 %1307
        %1309 = vrot.lane.b32.xlu0 %v1052, 104
        %v1310 = vpop.permute.xlu0 %1309
        %1311 = vrot.lane.b32.xlu0 %v1053, 104
        %v1312 = vpop.permute.xlu0 %1311
        %1313 = vrot.lane.b32.xlu0 %v1054, 104
        %v1314 = vpop.permute.xlu0 %1313
        %1315 = vrot.lane.b32.xlu0 %v1055, 104
        %v1316 = vpop.permute.xlu0 %1315
        %1317 = vrot.lane.b32.xlu0 %v1056, 104
        %v1318 = vpop.permute.xlu0 %1317
        %1319 = vrot.lane.b32.xlu0 %v1057, 104
        %v1320 = vpop.permute.xlu0 %1319
        %v1321 = vsel %vm422, %v1290, 0
        %v1323 = vsel %vm422, %v1292, 0
        %v1325 = vsel %vm422, %v1294, 0
        %v1327 = vsel %vm422, %v1296, 0
        %v1329 = vsel %vm422, %v1298, 0
        %v1331 = vsel %vm422, %v1300, 0
        %v1333 = vsel %vm422, %v1302, 0
        %v1335 = vsel %vm422, %v1304, 0
        %v1337 = vsel %vm422, %v1306, 0
        %v1339 = vsel %vm422, %v1308, 0
        %v1341 = vsel %vm422, %v1310, 0
        %v1343 = vsel %vm422, %v1312, 0
        %v1345 = vsel %vm422, %v1314, 0
        %v1347 = vsel %vm422, %v1316, 0
        %v1349 = vsel %vm422, %v1318, 0
        %v1351 = vsel %vm422, %v1320, 0
        %1353 = vmatprep.subr.mxu0 0.0
        %1354 = vmatpush1.msra.mxu0 %v1058
        %1355 = vmatprep.subr.mxu0 0.0
        %1356 = vmatpush1.msra.mxu0 %v1059
        %1357 = vmatprep.subr.mxu0 0.0
        %1358 = vmatpush1.msra.mxu0 %v1060
        %1359 = vmatprep.subr.mxu0 0.0
        %1360 = vmatpush1.msra.mxu0 %v1061
        %1361 = vmatprep.subr.mxu0 0.0
        %1362 = vmatpush1.msra.mxu0 0.0
        %1363 = vmatprep.subr.mxu0 0.0
        %1364 = vmatpush1.msra.mxu0 0.0
        %1365 = vmatprep.subr.mxu0 0.0
        %1366 = vmatpush1.msra.mxu0 0.0
        %1367 = vmatprep.subr.mxu0 0.0
        %1368 = vmatpush1.msra.mxu0 0.0
        %1369 = vmatprep.subr.mxu0 0.0
        %1370 = vmatpush1.msra.mxu0 0.0
        %1371 = vmatprep.subr.mxu0 0.0
        %1372 = vmatpush1.msra.mxu0 0.0
        %1373 = vmatprep.subr.mxu0 0.0
        %1374 = vmatpush1.msra.mxu0 0.0
        %1375 = vmatprep.subr.mxu0 0.0
        %1376 = vmatpush1.msra.mxu0 0.0
        %1377 = vmatprep.subr.mxu0 0.0
        %1378 = vmatpush1.msra.mxu0 0.0
        %1379 = vmatprep.subr.mxu0 0.0
        %1380 = vmatpush1.msra.mxu0 0.0
        %1381 = vmatprep.subr.mxu0 0.0
        %1382 = vmatpush1.msra.mxu0 0.0
        %1383 = vmatprep.subr.mxu0 0.0
        %1384 = vmatpush1.msra.mxu0 0.0
        %1385 = vmatprep.subr.mxu0 0.0
        %1386 = vmatpush1.msra.mxu0 0.0
        %1387 = vmatprep.subr.mxu0 0.0
        %1388 = vmatpush1.msra.mxu0 0.0
        %1389 = vmatprep.subr.mxu0 0.0
        %1390 = vmatpush1.msra.mxu0 0.0
        %1391 = vmatprep.subr.mxu0 0.0
        %1392 = vmatpush1.msra.mxu0 0.0
        %1393 = vmatprep.subr.mxu0 0.0
        %1394 = vmatpush1.msra.mxu0 0.0
        %1395 = vmatprep.subr.mxu0 0.0
        %1396 = vmatpush1.msra.mxu0 0.0
        %1397 = vmatprep.subr.mxu0 0.0
        %1398 = vmatpush1.msra.mxu0 0.0
        %1399 = vmatprep.subr.mxu0 0.0
        %1400 = vmatpush1.msra.mxu0 0.0
        %1401 = vmatprep.subr.mxu0 0.0
        %1402 = vmatpush1.msra.mxu0 0.0
        %1403 = vmatprep.subr.mxu0 0.0
        %1404 = vmatpush1.msra.mxu0 0.0
        %1405 = vmatprep.subr.mxu0 0.0
        %1406 = vmatpush1.msra.mxu0 0.0
        %1407 = vmatprep.subr.mxu0 0.0
        %1408 = vmatpush1.msra.mxu0 0.0
        %1409 = vmatprep.subr.mxu0 0.0
        %1410 = vmatpush1.msra.mxu0 0.0
        %1411 = vmatprep.subr.mxu0 0.0
        %1412 = vmatpush1.msra.mxu0 0.0
        %1413 = vmatprep.subr.mxu0 0.0
        %1414 = vmatpush1.msra.mxu0 0.0
        %1415 = vmatprep.subr.mxu0 0.0
        %1416 = vmatpush1.msra.mxu0 0.0
        %1417 = vmatprep.mubr.f32.mxu0 0.0
        %1418 = vmatmul.mubr.f32.gmra.mrb[0].mxu0 %v1321
        %v1419 = vpop.f32.mrb[0].mxu0
        %v1420 = vadd.f32 %v1195, %v1419
        %v1421 = vpop.f32.mrb[0].mxu0
        %1422 = vmatprep.mubr.f32.mxu0 0.0
        %1423 = vmatmul.mubr.f32.gmra.mrb[0].mxu0 %v1323
        %v1424 = vpop.f32.mrb[0].mxu0
        %v1425 = vadd.f32 %v1200, %v1424
        %v1426 = vpop.f32.mrb[0].mxu0
        %1427 = vmatprep.mubr.f32.mxu0 0.0
        %1428 = vmatmul.mubr.f32.gmra.mrb[0].mxu0 %v1325
        %v1429 = vpop.f32.mrb[0].mxu0
        %v1430 = vadd.f32 %v1205, %v1429
        %v1431 = vpop.f32.mrb[0].mxu0
        %1432 = vmatprep.mubr.f32.mxu0 0.0
        %1433 = vmatmul.mubr.f32.gmra.mrb[0].mxu0 %v1327
        %v1434 = vpop.f32.mrb[0].mxu0
        %v1435 = vadd.f32 %v1210, %v1434
        %v1436 = vpop.f32.mrb[0].mxu0
        %1437 = vmatprep.mubr.f32.mxu0 0.0
        %1438 = vmatmul.mubr.f32.gmra.mrb[0].mxu0 %v1329
        %v1439 = vpop.f32.mrb[0].mxu0
        %v1440 = vadd.f32 %v1215, %v1439
        %v1441 = vpop.f32.mrb[0].mxu0
        %1442 = vmatprep.mubr.f32.mxu0 0.0
        %1443 = vmatmul.mubr.f32.gmra.mrb[0].mxu0 %v1331
        %v1444 = vpop.f32.mrb[0].mxu0
        %v1445 = vadd.f32 %v1220, %v1444
        %v1446 = vpop.f32.mrb[0].mxu0
        %1447 = vmatprep.mubr.f32.mxu0 0.0
        %1448 = vmatmul.mubr.f32.gmra.mrb[0].mxu0 %v1333
        %v1449 = vpop.f32.mrb[0].mxu0
        %v1450 = vadd.f32 %v1225, %v1449
        %v1451 = vpop.f32.mrb[0].mxu0
        %1452 = vmatprep.mubr.f32.mxu0 0.0
        %1453 = vmatmul.mubr.f32.gmra.mrb[0].mxu0 %v1335
        %v1454 = vpop.f32.mrb[0].mxu0
        %v1455 = vadd.f32 %v1230, %v1454
        %v1456 = vpop.f32.mrb[0].mxu0
        %1457 = vmatprep.mubr.f32.mxu0 0.0
        %1458 = vmatmul.mubr.f32.gmra.mrb[0].mxu0 %v1337
        %v1459 = vpop.f32.mrb[0].mxu0
        %v1460 = vadd.f32 %v1235, %v1459
        %v1461 = vpop.f32.mrb[0].mxu0
        %1462 = vmatprep.mubr.f32.mxu0 0.0
        %1463 = vmatmul.mubr.f32.gmra.mrb[0].mxu0 %v1339
        %v1464 = vpop.f32.mrb[0].mxu0
        %v1465 = vadd.f32 %v1240, %v1464
        %v1466 = vpop.f32.mrb[0].mxu0
        %1467 = vmatprep.mubr.f32.mxu0 0.0
        %1468 = vmatmul.mubr.f32.gmra.mrb[0].mxu0 %v1341
        %v1469 = vpop.f32.mrb[0].mxu0
        %v1470 = vadd.f32 %v1245, %v1469
        %v1471 = vpop.f32.mrb[0].mxu0
        %1472 = vmatprep.mubr.f32.mxu0 0.0
        %1473 = vmatmul.mubr.f32.gmra.mrb[0].mxu0 %v1343
        %v1474 = vpop.f32.mrb[0].mxu0
        %v1475 = vadd.f32 %v1250, %v1474
        %v1476 = vpop.f32.mrb[0].mxu0
        %1477 = vmatprep.mubr.f32.mxu0 0.0
        %1478 = vmatmul.mubr.f32.gmra.mrb[0].mxu0 %v1345
        %v1479 = vpop.f32.mrb[0].mxu0
        %v1480 = vadd.f32 %v1255, %v1479
        %v1481 = vpop.f32.mrb[0].mxu0
        %1482 = vmatprep.mubr.f32.mxu0 0.0
        %1483 = vmatmul.mubr.f32.gmra.mrb[0].mxu0 %v1347
        %v1484 = vpop.f32.mrb[0].mxu0
        %v1485 = vadd.f32 %v1260, %v1484
        %v1486 = vpop.f32.mrb[0].mxu0
        %1487 = vmatprep.mubr.f32.mxu0 0.0
        %1488 = vmatmul.mubr.f32.gmra.mrb[0].mxu0 %v1349
        %v1489 = vpop.f32.mrb[0].mxu0
        %v1490 = vadd.f32 %v1265, %v1489
        %v1491 = vpop.f32.mrb[0].mxu0
        %1492 = vmatprep.mubr.f32.mxu0 0.0
        %1493 = vmatmul.mubr.f32.gmra.mrb[0].mxu0 %v1351
        %v1494 = vpop.f32.mrb[0].mxu0
        %v1495 = vadd.f32 %v1270, %v1494
        %v1496 = vpop.f32.mrb[0].mxu0
        %1497 = vdwg.mxu0
        %v1498 = vld [vmem:[#allocation5 + $0x98] sm:$0x1]
        %v1499 = vlaneseq
        %v1500 = vshrl.u32 %v1499, 7
        %v1501 = vsub.s32 0, %v1500
        %v1502 = vrot.slane %v1498, %v1501
        %v1503 = vadd.f32 %v1420, %v1502
        %v1504 = vadd.f32 %v1425, %v1502
        %v1505 = vadd.f32 %v1430, %v1502
        %v1506 = vadd.f32 %v1435, %v1502
        %v1507 = vadd.f32 %v1440, %v1502
        %v1508 = vadd.f32 %v1445, %v1502
        %v1509 = vadd.f32 %v1450, %v1502
        %v1510 = vadd.f32 %v1455, %v1502
        %v1511 = vadd.f32 %v1460, %v1502
        %v1512 = vadd.f32 %v1465, %v1502
        %v1513 = vadd.f32 %v1470, %v1502
        %v1514 = vadd.f32 %v1475, %v1502
        %v1515 = vadd.f32 %v1480, %v1502
        %v1516 = vadd.f32 %v1485, %v1502
        %v1517 = vadd.f32 %v1490, %v1502
        %v1518 = vadd.f32 %v1495, %v1502
        %v1519 = vmax.f32 %v1503, 0.0
        %v1520 = vmax.f32 %v1504, 0.0
        %v1521 = vmax.f32 %v1505, 0.0
        %v1522 = vmax.f32 %v1506, 0.0
        %v1523 = vmax.f32 %v1507, 0.0
        %v1524 = vmax.f32 %v1508, 0.0
        %v1525 = vmax.f32 %v1509, 0.0
        %v1526 = vmax.f32 %v1510, 0.0
        %v1527 = vmax.f32 %v1511, 0.0
        %v1528 = vmax.f32 %v1512, 0.0
        %v1529 = vmax.f32 %v1513, 0.0
        %v1530 = vmax.f32 %v1514, 0.0
        %v1531 = vmax.f32 %v1515, 0.0
        %v1532 = vmax.f32 %v1516, 0.0
        %v1533 = vmax.f32 %v1517, 0.0
        %v1534 = vmax.f32 %v1518, 0.0
        %v1535 = vld [vmem:[#allocation5 + $0xa0] sm:$0xff]
        %v1536 = vld [vmem:[#allocation5 + $0xa8] sm:$0xff]
        %v1537 = vld [vmem:[#allocation5 + $0xb0] sm:$0xff]
        %v1538 = vld [vmem:[#allocation5 + $0xb8] sm:$0xff]
        %v1539 = vld [vmem:[#allocation5 + $0xc0] sm:$0x1]
        %v1540 = vlaneseq
        %v1541 = vshrl.u32 %v1540, 7
        %v1542 = vsub.s32 0, %v1541
        %v1543 = vrot.slane %v1539, %v1542
        %v1545 = vsel %vm422, %v1519, 0
        %v1548 = vsel %vm422, %v1520, 0
        %v1551 = vsel %vm422, %v1521, 0
        %v1554 = vsel %vm422, %v1522, 0
        %v1557 = vsel %vm422, %v1523, 0
        %v1560 = vsel %vm422, %v1524, 0
        %v1563 = vsel %vm422, %v1525, 0
        %v1566 = vsel %vm422, %v1526, 0
        %v1569 = vsel %vm422, %v1527, 0
        %v1572 = vsel %vm422, %v1528, 0
        %v1575 = vsel %vm422, %v1529, 0
        %v1578 = vsel %vm422, %v1530, 0
        %v1581 = vsel %vm422, %v1531, 0
        %v1584 = vsel %vm422, %v1532, 0
        %v1587 = vsel %vm422, %v1533, 0
        %v1590 = vsel %vm422, %v1534, 0
        %1592 = vmatprep.subr.mxu0 0.0
        %1593 = vmatpush1.msra.mxu0 %v1535
        %1594 = vmatprep.subr.mxu0 0.0
        %1595 = vmatpush1.msra.mxu0 %v1536
        %1596 = vmatprep.subr.mxu0 0.0
        %1597 = vmatpush1.msra.mxu0 %v1537
        %1598 = vmatprep.subr.mxu0 0.0
        %1599 = vmatpush1.msra.mxu0 %v1538
        %1600 = vmatprep.subr.mxu0 0.0
        %1601 = vmatpush1.msra.mxu0 0.0
        %1602 = vmatprep.subr.mxu0 0.0
        %1603 = vmatpush1.msra.mxu0 0.0
        %1604 = vmatprep.subr.mxu0 0.0
        %1605 = vmatpush1.msra.mxu0 0.0
        %1606 = vmatprep.subr.mxu0 0.0
        %1607 = vmatpush1.msra.mxu0 0.0
        %1608 = vmatprep.subr.mxu0 0.0
        %1609 = vmatpush1.msra.mxu0 0.0
        %1610 = vmatprep.subr.mxu0 0.0
        %1611 = vmatpush1.msra.mxu0 0.0
        %1612 = vmatprep.subr.mxu0 0.0
        %1613 = vmatpush1.msra.mxu0 0.0
        %1614 = vmatprep.subr.mxu0 0.0
        %1615 = vmatpush1.msra.mxu0 0.0
        %1616 = vmatprep.subr.mxu0 0.0
        %1617 = vmatpush1.msra.mxu0 0.0
        %1618 = vmatprep.subr.mxu0 0.0
        %1619 = vmatpush1.msra.mxu0 0.0
        %1620 = vmatprep.subr.mxu0 0.0
        %1621 = vmatpush1.msra.mxu0 0.0
        %1622 = vmatprep.subr.mxu0 0.0
        %1623 = vmatpush1.msra.mxu0 0.0
        %1624 = vmatprep.subr.mxu0 0.0
        %1625 = vmatpush1.msra.mxu0 0.0
        %1626 = vmatprep.subr.mxu0 0.0
        %1627 = vmatpush1.msra.mxu0 0.0
        %1628 = vmatprep.subr.mxu0 0.0
        %1629 = vmatpush1.msra.mxu0 0.0
        %1630 = vmatprep.subr.mxu0 0.0
        %1631 = vmatpush1.msra.mxu0 0.0
        %1632 = vmatprep.subr.mxu0 0.0
        %1633 = vmatpush1.msra.mxu0 0.0
        %1634 = vmatprep.subr.mxu0 0.0
        %1635 = vmatpush1.msra.mxu0 0.0
        %1636 = vmatprep.subr.mxu0 0.0
        %1637 = vmatpush1.msra.mxu0 0.0
        %1638 = vmatprep.subr.mxu0 0.0
        %1639 = vmatpush1.msra.mxu0 0.0
        %1640 = vmatprep.subr.mxu0 0.0
        %1641 = vmatpush1.msra.mxu0 0.0
        %1642 = vmatprep.subr.mxu0 0.0
        %1643 = vmatpush1.msra.mxu0 0.0
        %1644 = vmatprep.subr.mxu0 0.0
        %1645 = vmatpush1.msra.mxu0 0.0
        %1646 = vmatprep.subr.mxu0 0.0
        %1647 = vmatpush1.msra.mxu0 0.0
        %1648 = vmatprep.subr.mxu0 0.0
        %1649 = vmatpush1.msra.mxu0 0.0
        %1650 = vmatprep.subr.mxu0 0.0
        %1651 = vmatpush1.msra.mxu0 0.0
        %1652 = vmatprep.subr.mxu0 0.0
        %1653 = vmatpush1.msra.mxu0 0.0
        %1654 = vmatprep.subr.mxu0 0.0
        %1655 = vmatpush1.msra.mxu0 0.0
        %1656 = vmatprep.mubr.f32.mxu0 0.0
        %1657 = vmatmul.mubr.f32.gmra.mrb[0].mxu0 %v1545
        %v1658 = vpop.f32.mrb[0].mxu0
        %v1659 = vadd.f32 %v1543, %v1658
        %v1660 = vpop.f32.mrb[0].mxu0
        %1661 = vmatprep.mubr.f32.mxu0 0.0
        %1662 = vmatmul.mubr.f32.gmra.mrb[0].mxu0 %v1548
        %v1663 = vpop.f32.mrb[0].mxu0
        %v1664 = vadd.f32 %v1543, %v1663
        %v1665 = vpop.f32.mrb[0].mxu0
        %1666 = vmatprep.mubr.f32.mxu0 0.0
        %1667 = vmatmul.mubr.f32.gmra.mrb[0].mxu0 %v1551
        %v1668 = vpop.f32.mrb[0].mxu0
        %v1669 = vadd.f32 %v1543, %v1668
        %v1670 = vpop.f32.mrb[0].mxu0
        %1671 = vmatprep.mubr.f32.mxu0 0.0
        %1672 = vmatmul.mubr.f32.gmra.mrb[0].mxu0 %v1554
        %v1673 = vpop.f32.mrb[0].mxu0
        %v1674 = vadd.f32 %v1543, %v1673
        %v1675 = vpop.f32.mrb[0].mxu0
        %1676 = vmatprep.mubr.f32.mxu0 0.0
        %1677 = vmatmul.mubr.f32.gmra.mrb[0].mxu0 %v1557
        %v1678 = vpop.f32.mrb[0].mxu0
        %v1679 = vadd.f32 %v1543, %v1678
        %v1680 = vpop.f32.mrb[0].mxu0
        %1681 = vmatprep.mubr.f32.mxu0 0.0
        %1682 = vmatmul.mubr.f32.gmra.mrb[0].mxu0 %v1560
        %v1683 = vpop.f32.mrb[0].mxu0
        %v1684 = vadd.f32 %v1543, %v1683
        %v1685 = vpop.f32.mrb[0].mxu0
        %1686 = vmatprep.mubr.f32.mxu0 0.0
        %1687 = vmatmul.mubr.f32.gmra.mrb[0].mxu0 %v1563
        %v1688 = vpop.f32.mrb[0].mxu0
        %v1689 = vadd.f32 %v1543, %v1688
        %v1690 = vpop.f32.mrb[0].mxu0
        %1691 = vmatprep.mubr.f32.mxu0 0.0
        %1692 = vmatmul.mubr.f32.gmra.mrb[0].mxu0 %v1566
        %v1693 = vpop.f32.mrb[0].mxu0
        %v1694 = vadd.f32 %v1543, %v1693
        %v1695 = vpop.f32.mrb[0].mxu0
        %1696 = vmatprep.mubr.f32.mxu0 0.0
        %1697 = vmatmul.mubr.f32.gmra.mrb[0].mxu0 %v1569
        %v1698 = vpop.f32.mrb[0].mxu0
        %v1699 = vadd.f32 %v1543, %v1698
        %v1700 = vpop.f32.mrb[0].mxu0
        %1701 = vmatprep.mubr.f32.mxu0 0.0
        %1702 = vmatmul.mubr.f32.gmra.mrb[0].mxu0 %v1572
        %v1703 = vpop.f32.mrb[0].mxu0
        %v1704 = vadd.f32 %v1543, %v1703
        %v1705 = vpop.f32.mrb[0].mxu0
        %1706 = vmatprep.mubr.f32.mxu0 0.0
        %1707 = vmatmul.mubr.f32.gmra.mrb[0].mxu0 %v1575
        %v1708 = vpop.f32.mrb[0].mxu0
        %v1709 = vadd.f32 %v1543, %v1708
        %v1710 = vpop.f32.mrb[0].mxu0
        %1711 = vmatprep.mubr.f32.mxu0 0.0
        %1712 = vmatmul.mubr.f32.gmra.mrb[0].mxu0 %v1578
        %v1713 = vpop.f32.mrb[0].mxu0
        %v1714 = vadd.f32 %v1543, %v1713
        %v1715 = vpop.f32.mrb[0].mxu0
        %1716 = vmatprep.mubr.f32.mxu0 0.0
        %1717 = vmatmul.mubr.f32.gmra.mrb[0].mxu0 %v1581
        %v1718 = vpop.f32.mrb[0].mxu0
        %v1719 = vadd.f32 %v1543, %v1718
        %v1720 = vpop.f32.mrb[0].mxu0
        %1721 = vmatprep.mubr.f32.mxu0 0.0
        %1722 = vmatmul.mubr.f32.gmra.mrb[0].mxu0 %v1584
        %v1723 = vpop.f32.mrb[0].mxu0
        %v1724 = vadd.f32 %v1543, %v1723
        %v1725 = vpop.f32.mrb[0].mxu0
        %1726 = vmatprep.mubr.f32.mxu0 0.0
        %1727 = vmatmul.mubr.f32.gmra.mrb[0].mxu0 %v1587
        %v1728 = vpop.f32.mrb[0].mxu0
        %v1729 = vadd.f32 %v1543, %v1728
        %v1730 = vpop.f32.mrb[0].mxu0
        %1731 = vmatprep.mubr.f32.mxu0 0.0
        %1732 = vmatmul.mubr.f32.gmra.mrb[0].mxu0 %v1590
        %v1733 = vpop.f32.mrb[0].mxu0
        %v1734 = vadd.f32 %v1543, %v1733
        %v1735 = vpop.f32.mrb[0].mxu0
        %1736 = vdwg.mxu0
        %1737 = vst.msk [vmem:[%s176] sm:$0xff] %vm422, %v756
        %1738 = vst.msk [vmem:[%s176 + $0x8] sm:$0xff] %vm422, %v761
        %1739 = vst.msk [vmem:[%s176 + $0x10] sm:$0xff] %vm422, %v766
        %1740 = vst.msk [vmem:[%s176 + $0x18] sm:$0xff] %vm422, %v771
        %1741 = vst.msk [vmem:[%s176 + $0x20] sm:$0xff] %vm422, %v776
        %1742 = vst.msk [vmem:[%s176 + $0x28] sm:$0xff] %vm422, %v781
        %1743 = vst.msk [vmem:[%s176 + $0x30] sm:$0xff] %vm422, %v786
        %1744 = vst.msk [vmem:[%s176 + $0x38] sm:$0xff] %vm422, %v791
        %1745 = vst.msk [vmem:[%s176 + $0x40] sm:$0xff] %vm422, %v796
        %1746 = vst.msk [vmem:[%s176 + $0x48] sm:$0xff] %vm422, %v801
        %1747 = vst.msk [vmem:[%s176 + $0x50] sm:$0xff] %vm422, %v806
        %1748 = vst.msk [vmem:[%s176 + $0x58] sm:$0xff] %vm422, %v811
        %1749 = vst.msk [vmem:[%s176 + $0x60] sm:$0xff] %vm422, %v816
        %1750 = vst.msk [vmem:[%s176 + $0x68] sm:$0xff] %vm422, %v821
        %1751 = vst.msk [vmem:[%s176 + $0x70] sm:$0xff] %vm422, %v826
        %1752 = vst.msk [vmem:[%s176 + $0x78] sm:$0xff] %vm422, %v831
        %vm1753 = vcmask 523520
        %1754 = vst.msk [vmem:[%s176] sm:$0xff] %vm1753, %v834
        %1755 = vst.msk [vmem:[%s176 + $0x8] sm:$0xff] %vm1753, %v835
        %1756 = vst.msk [vmem:[%s176 + $0x10] sm:$0xff] %vm1753, %v836
        %1757 = vst.msk [vmem:[%s176 + $0x18] sm:$0xff] %vm1753, %v837
        %1758 = vst.msk [vmem:[%s176 + $0x20] sm:$0xff] %vm1753, %v838
        %1759 = vst.msk [vmem:[%s176 + $0x28] sm:$0xff] %vm1753, %v839
        %1760 = vst.msk [vmem:[%s176 + $0x30] sm:$0xff] %vm1753, %v840
        %1761 = vst.msk [vmem:[%s176 + $0x38] sm:$0xff] %vm1753, %v841
        %1762 = vst.msk [vmem:[%s176 + $0x40] sm:$0xff] %vm1753, %v842
        %1763 = vst.msk [vmem:[%s176 + $0x48] sm:$0xff] %vm1753, %v843
        %1764 = vst.msk [vmem:[%s176 + $0x50] sm:$0xff] %vm1753, %v844
        %1765 = vst.msk [vmem:[%s176 + $0x58] sm:$0xff] %vm1753, %v845
        %1766 = vst.msk [vmem:[%s176 + $0x60] sm:$0xff] %vm1753, %v846
        %1767 = vst.msk [vmem:[%s176 + $0x68] sm:$0xff] %vm1753, %v847
        %1768 = vst.msk [vmem:[%s176 + $0x70] sm:$0xff] %vm1753, %v848
        %1769 = vst.msk [vmem:[%s176 + $0x78] sm:$0xff] %vm1753, %v849
        %1770 = vrot.lane.b32.xlu0 %v1042, 40
        %v1771 = vpop.permute.xlu0 %1770
        %1772 = vrot.lane.b32.xlu0 %v1043, 40
        %v1773 = vpop.permute.xlu0 %1772
        %1774 = vrot.lane.b32.xlu0 %v1044, 40
        %v1775 = vpop.permute.xlu0 %1774
        %1776 = vrot.lane.b32.xlu0 %v1045, 40
        %v1777 = vpop.permute.xlu0 %1776
        %1778 = vrot.lane.b32.xlu0 %v1046, 40
        %v1779 = vpop.permute.xlu0 %1778
        %1780 = vrot.lane.b32.xlu0 %v1047, 40
        %v1781 = vpop.permute.xlu0 %1780
        %1782 = vrot.lane.b32.xlu0 %v1048, 40
        %v1783 = vpop.permute.xlu0 %1782
        %1784 = vrot.lane.b32.xlu0 %v1049, 40
        %v1785 = vpop.permute.xlu0 %1784
        %1786 = vrot.lane.b32.xlu0 %v1050, 40
        %v1787 = vpop.permute.xlu0 %1786
        %1788 = vrot.lane.b32.xlu0 %v1051, 40
        %v1789 = vpop.permute.xlu0 %1788
        %1790 = vrot.lane.b32.xlu0 %v1052, 40
        %v1791 = vpop.permute.xlu0 %1790
        %1792 = vrot.lane.b32.xlu0 %v1053, 40
        %v1793 = vpop.permute.xlu0 %1792
        %1794 = vrot.lane.b32.xlu0 %v1054, 40
        %v1795 = vpop.permute.xlu0 %1794
        %1796 = vrot.lane.b32.xlu0 %v1055, 40
        %v1797 = vpop.permute.xlu0 %1796
        %1798 = vrot.lane.b32.xlu0 %v1056, 40
        %v1799 = vpop.permute.xlu0 %1798
        %1800 = vrot.lane.b32.xlu0 %v1057, 40
        %v1801 = vpop.permute.xlu0 %1800
        %vm1818 = vcmask 785920
        %1819 = vst.msk [vmem:[%s176] sm:$0xff] %vm1818, %v1771
        %1820 = vst.msk [vmem:[%s176 + $0x8] sm:$0xff] %vm1818, %v1773
        %1821 = vst.msk [vmem:[%s176 + $0x10] sm:$0xff] %vm1818, %v1775
        %1822 = vst.msk [vmem:[%s176 + $0x18] sm:$0xff] %vm1818, %v1777
        %1823 = vst.msk [vmem:[%s176 + $0x20] sm:$0xff] %vm1818, %v1779
        %1824 = vst.msk [vmem:[%s176 + $0x28] sm:$0xff] %vm1818, %v1781
        %1825 = vst.msk [vmem:[%s176 + $0x30] sm:$0xff] %vm1818, %v1783
        %1826 = vst.msk [vmem:[%s176 + $0x38] sm:$0xff] %vm1818, %v1785
        %1827 = vst.msk [vmem:[%s176 + $0x40] sm:$0xff] %vm1818, %v1787
        %1828 = vst.msk [vmem:[%s176 + $0x48] sm:$0xff] %vm1818, %v1789
        %1829 = vst.msk [vmem:[%s176 + $0x50] sm:$0xff] %vm1818, %v1791
        %1830 = vst.msk [vmem:[%s176 + $0x58] sm:$0xff] %vm1818, %v1793
        %1831 = vst.msk [vmem:[%s176 + $0x60] sm:$0xff] %vm1818, %v1795
        %1832 = vst.msk [vmem:[%s176 + $0x68] sm:$0xff] %vm1818, %v1797
        %1833 = vst.msk [vmem:[%s176 + $0x70] sm:$0xff] %vm1818, %v1799
        %1834 = vst.msk [vmem:[%s176 + $0x78] sm:$0xff] %vm1818, %v1801
        %1851 = vrot.lane.b32.xlu0 %v1659, 96
        %v1852 = vpop.permute.xlu0 %1851
        %1853 = vrot.lane.b32.xlu0 %v1664, 96
        %v1854 = vpop.permute.xlu0 %1853
        %1855 = vrot.lane.b32.xlu0 %v1669, 96
        %v1856 = vpop.permute.xlu0 %1855
        %1857 = vrot.lane.b32.xlu0 %v1674, 96
        %v1858 = vpop.permute.xlu0 %1857
        %1859 = vrot.lane.b32.xlu0 %v1679, 96
        %v1860 = vpop.permute.xlu0 %1859
        %1861 = vrot.lane.b32.xlu0 %v1684, 96
        %v1862 = vpop.permute.xlu0 %1861
        %1863 = vrot.lane.b32.xlu0 %v1689, 96
        %v1864 = vpop.permute.xlu0 %1863
        %1865 = vrot.lane.b32.xlu0 %v1694, 96
        %v1866 = vpop.permute.xlu0 %1865
        %1867 = vrot.lane.b32.xlu0 %v1699, 96
        %v1868 = vpop.permute.xlu0 %1867
        %1869 = vrot.lane.b32.xlu0 %v1704, 96
        %v1870 = vpop.permute.xlu0 %1869
        %1871 = vrot.lane.b32.xlu0 %v1709, 96
        %v1872 = vpop.permute.xlu0 %1871
        %1873 = vrot.lane.b32.xlu0 %v1714, 96
        %v1874 = vpop.permute.xlu0 %1873
        %1875 = vrot.lane.b32.xlu0 %v1719, 96
        %v1876 = vpop.permute.xlu0 %1875
        %1877 = vrot.lane.b32.xlu0 %v1724, 96
        %v1878 = vpop.permute.xlu0 %1877
        %1879 = vrot.lane.b32.xlu0 %v1729, 96
        %v1880 = vpop.permute.xlu0 %1879
        %1881 = vrot.lane.b32.xlu0 %v1734, 96
        %v1882 = vpop.permute.xlu0 %1881
        %vm1899 = vcmask 917248
        %1900 = vst.msk [vmem:[%s176] sm:$0xff] %vm1899, %v1852
        %1901 = vst.msk [vmem:[%s176 + $0x8] sm:$0xff] %vm1899, %v1854
        %1902 = vst.msk [vmem:[%s176 + $0x10] sm:$0xff] %vm1899, %v1856
        %1903 = vst.msk [vmem:[%s176 + $0x18] sm:$0xff] %vm1899, %v1858
        %1904 = vst.msk [vmem:[%s176 + $0x20] sm:$0xff] %vm1899, %v1860
        %1905 = vst.msk [vmem:[%s176 + $0x28] sm:$0xff] %vm1899, %v1862
        %1906 = vst.msk [vmem:[%s176 + $0x30] sm:$0xff] %vm1899, %v1864
        %1907 = vst.msk [vmem:[%s176 + $0x38] sm:$0xff] %vm1899, %v1866
        %1908 = vst.msk [vmem:[%s176 + $0x40] sm:$0xff] %vm1899, %v1868
        %1909 = vst.msk [vmem:[%s176 + $0x48] sm:$0xff] %vm1899, %v1870
        %1910 = vst.msk [vmem:[%s176 + $0x50] sm:$0xff] %vm1899, %v1872
        %1911 = vst.msk [vmem:[%s176 + $0x58] sm:$0xff] %vm1899, %v1874
        %1912 = vst.msk [vmem:[%s176 + $0x60] sm:$0xff] %vm1899, %v1876
        %1913 = vst.msk [vmem:[%s176 + $0x68] sm:$0xff] %vm1899, %v1878
        %1914 = vst.msk [vmem:[%s176 + $0x70] sm:$0xff] %vm1899, %v1880
        %1915 = vst.msk [vmem:[%s176 + $0x78] sm:$0xff] %vm1899, %v1882
        %vm1916 = vcmask 1048448
        %1917 = vst.msk [vmem:[%s176] sm:$0xff] %vm1916, 0.0
        %1918 = vst.msk [vmem:[%s176 + $0x8] sm:$0xff] %vm1916, 0.0
        %1919 = vst.msk [vmem:[%s176 + $0x10] sm:$0xff] %vm1916, 0.0
        %1920 = vst.msk [vmem:[%s176 + $0x18] sm:$0xff] %vm1916, 0.0
        %1921 = vst.msk [vmem:[%s176 + $0x20] sm:$0xff] %vm1916, 0.0
        %1922 = vst.msk [vmem:[%s176 + $0x28] sm:$0xff] %vm1916, 0.0
        %1923 = vst.msk [vmem:[%s176 + $0x30] sm:$0xff] %vm1916, 0.0
        %1924 = vst.msk [vmem:[%s176 + $0x38] sm:$0xff] %vm1916, 0.0
        %1925 = vst.msk [vmem:[%s176 + $0x40] sm:$0xff] %vm1916, 0.0
        %1926 = vst.msk [vmem:[%s176 + $0x48] sm:$0xff] %vm1916, 0.0
        %1927 = vst.msk [vmem:[%s176 + $0x50] sm:$0xff] %vm1916, 0.0
        %1928 = vst.msk [vmem:[%s176 + $0x58] sm:$0xff] %vm1916, 0.0
        %1929 = vst.msk [vmem:[%s176 + $0x60] sm:$0xff] %vm1916, 0.0
        %1930 = vst.msk [vmem:[%s176 + $0x68] sm:$0xff] %vm1916, 0.0
        %1931 = vst.msk [vmem:[%s176 + $0x70] sm:$0xff] %vm1916, 0.0
        %1932 = vst.msk [vmem:[%s176 + $0x78] sm:$0xff] %vm1916, 0.0
        %s1933 = sand.u32 %s75, 1
        %s1934 = scalar_lea.sflag [#allocation4], %s1933
        %s1935 = sand.u32 %s75, 1
        %s1936 = smul.addr %s1935, 128
        %s1937 = scalar_lea.vmem [#allocation7], %s1936
        // Predicated region
        $region37: #{tpu_custom_call.1} parent=27 // pred_check
          %p1938 = pneg %p85
        $region38: #{tpu_custom_call.1} parent=27 // pred_check_branch
          %1940 = sbr.rel (%p1938) target = $region40
        $region39: #{tpu_custom_call.1} parent=27 // pred_region
          %s1941 = smul.u32 16, %s20
          %s1943 = ssub.s32 2048, 2048
          %1944 = vsyncadd %s1934, %s1943
          %s1945 = smul.addr %s1941, 128
          %s1946 = scalar_lea.hbm %s2, %s1945
          %s1947 = sshll.u32 %s1937, 4
          %s1948 = int_to_ptr.vmem [resolvable:$true] %s1947
          %1953 = dma.vmem_to_hbm [thread:$0]  %s1948, 2048, %s1946, %s1934, 128, 128, 8
        $region40: #{tpu_custom_call.1} parent=27 // pred_fallthru
          _
      $region28: #{tpu_custom_call.1} parent=5 // pred_fallthru
        _
      %p1954 = scmp.le.s32.totalorder 2, %s15
      // Predicated region
      $region41: #{tpu_custom_call.1} parent=5 // pred_check
        %p1955 = pneg %p1954
      $region42: #{tpu_custom_call.1} parent=5 // pred_check_branch
        %1957 = sbr.rel (%p1955) target = $region44
      $region43: #{tpu_custom_call.1} parent=5 // pred_region
        %s1958 = ssub.s32 %s15, 2
        // Predicated region
        $region45: #{tpu_custom_call.1} parent=43 // pred_check
          %p1959 = pneg %p91
        $region46: #{tpu_custom_call.1} parent=43 // pred_check_branch
          %1961 = sbr.rel (%p1959) target = $region48
        $region47: #{tpu_custom_call.1} parent=43 // pred_region
          %s1962 = sand.u32 %s76, 1
          %s1963 = scalar_lea.sflag [#allocation4], %s1962
          %s1964 = sand.u32 %s76, 1
          %s1965 = smul.addr %s1964, 128
          %s1966 = scalar_lea.vmem [#allocation7], %s1965
          %1967 = dma.done %s1963, 2048
        $region48: #{tpu_custom_call.1} parent=43 // pred_fallthru
          _
      $region44: #{tpu_custom_call.1} parent=5 // pred_fallthru
        _
    $region6: #{tpu_custom_call.1} parent=1 // loop_footer
      %s19 = sadd.s32 1, %s15
    $region7: #{tpu_custom_call.1} parent=1 // loop_footer_branch
      %14 = sbr.rel target = $region3
    $region8: #{tpu_custom_call.1} parent=1 // loop_exit
      _
    %1968 = vsyncpa [#allocation3], 1
    %s1969 = scalar_lea.sflag [#allocation3], 1
    %1970 = vsyncpa %s1969, 1
    %1971 = vsyncpa [#allocation6], 1
    %1972 = vsyncpa [#allocation4], 1
    %s1973 = scalar_lea.sflag [#allocation4], 1
    %1974 = vsyncpa %s1973, 1

</llo_original>
